<compile_context>
chip_gen: v5e
topology: v5e:2x2
jax: 0.10.0
libtpu: 0.0.40
codegen_flags: <defaults>
</compile_context>

<pallas_src>
import jax
import jax.numpy as jnp
from jax.experimental import pallas as pl
from jax.experimental.pallas import tpu as pltpu

block_size = 32
n_embd = 64
head_size = 16
num_heads = n_embd // head_size     # 4
dropout = 0.0                       # p = 0.0 -> identity; omitted in the kernel


def mha_kernel(x_ref, wqkv_ref, wproj_ref, bproj_ref, o_ref):
    M, C = x_ref.shape              # M = B*T = 64, C = n_embd = 64
    H = head_size
    NH = C // H                     # 4
    T = block_size
    B = M // T

    # Fused Q/K/V projection for ALL heads: one wide (M, C) @ (C, 3C) MXU matmul.
    # The C**-0.5 attention scale is already folded into the Q columns of wqkv.
    qkv = jnp.dot(x_ref[...], wqkv_ref[...],
                  preferred_element_type=jnp.float32)            # (M, 3C)
    q = qkv[:, :C]
    k = qkv[:, C:2 * C]
    v = qkv[:, 2 * C:]

    # Additive causal mask built in-kernel (no extra HBM input / DMA stream).
    row = jax.lax.broadcasted_iota(jnp.int32, (T, T), 0)
    col = jax.lax.broadcasted_iota(jnp.int32, (T, T), 1)
    mask = jnp.where(row >= col, jnp.float32(0.0), jnp.float32(-1e30))   # (T, T)

    ctxs = []
    for h in range(NH):                                          # static unroll, NH = 4
        qh = q[:, h * H:(h + 1) * H].reshape(B, T, H)
        kh = k[:, h * H:(h + 1) * H].reshape(B, T, H)
        vh = v[:, h * H:(h + 1) * H].reshape(B, T, H)

        # scores: contract the head dim of q and k directly (no explicit transpose)
        s = jnp.einsum('btd,bsd->bts', qh, kh,
                       preferred_element_type=jnp.float32)       # (B, T, T)
        s = s + mask                                             # implicit (T,T)->(B,T,T)

        # numerically stable softmax with exact division (tight parity with reference)
        m = jnp.max(s, axis=-1, keepdims=True)
        e = jnp.exp(s - m)
        p = e / jnp.sum(e, axis=-1, keepdims=True)

        # dropout(p=0.0) == identity

        ctx = jnp.einsum('bts,bsd->btd', p, vh,
                         preferred_element_type=jnp.float32)     # (B, T, H)
        ctxs.append(ctx.reshape(M, H))

    # "Concat over heads" + output projection as ONE K=C MXU matmul.
    cat = jnp.concatenate(ctxs, axis=1)                          # (M, C)
    y = jnp.dot(cat, wproj_ref[...],
                preferred_element_type=jnp.float32)              # (M, C)
    y = y + bproj_ref[...]                                       # (1, C) bias broadcast
    o_ref[...] = y.astype(o_ref.dtype)


def prepare_mha_params(w_q, w_k, w_v, w_proj, b_proj):
    """One-time (init-time) parameter transform — NOT on the per-call hot path.

    Returns (w_qkv, w_proj, b_proj_2d) where w_qkv = [Wq*C**-0.5 | Wk | Wv] is (C, 3C)
    with the attention scale folded into the Q columns (0.125 is an exact power of two,
    so this is numerically identical to scaling the scores), and the bias is (1, C)."""
    C = w_q.shape[0]
    scale = jnp.float32(C) ** jnp.float32(-0.5)
    w_qkv = jnp.concatenate([w_q * scale, w_k, w_v], axis=1).astype(jnp.float32)
    return w_qkv, w_proj.astype(jnp.float32), b_proj.reshape(1, C).astype(jnp.float32)


def mha_forward(x, w_qkv, w_proj, b_proj_2d):
    """x: (B, T, C); w_qkv: (C, 3C) with scale pre-folded into the Q columns;
    w_proj: (C, C) (pre-transposed, (in, out)); b_proj_2d: (1, C).  Returns (B, T, C)."""
    B, T, C = x.shape
    M = B * T
    x2 = x.reshape(M, C)            # free metadata reshape in XLA

    out2 = pl.pallas_call(
        mha_kernel,
        out_shape=jax.ShapeDtypeStruct((M, C), x.dtype),
        grid_spec=pltpu.PrefetchScalarGridSpec(
            num_scalar_prefetch=0,
            grid=(1,),              # single step: whole problem lives in VMEM
            in_specs=[
                pl.BlockSpec((M, C), lambda i: (0, 0)),
                pl.BlockSpec((C, 3 * C), lambda i: (0, 0)),
                pl.BlockSpec((C, C), lambda i: (0, 0)),
                pl.BlockSpec((1, C), lambda i: (0, 0)),
            ],
            out_specs=pl.BlockSpec((M, C), lambda i: (0, 0)),
        ),
        compiler_params=pltpu.CompilerParams(
            dimension_semantics=("arbitrary",)),
    )(x2, w_qkv, w_proj, b_proj_2d)

    return out2.reshape(B, T, C)


def mha_reference(x, w_q, w_k, w_v, w_proj, b_proj):
    """Pure-JAX reference mirroring the PyTorch MultiHeadAttention forward."""
    B, T, C = x.shape
    H, NH = head_size, num_heads
    q = x @ w_q
    k = x @ w_k
    v = x @ w_v
    tril = jnp.tril(jnp.ones((T, T), dtype=bool))
    heads = []
    for h in range(NH):
        qh = q[..., h * H:(h + 1) * H]
        kh = k[..., h * H:(h + 1) * H]
        vh = v[..., h * H:(h + 1) * H]
        wei = (qh @ jnp.swapaxes(kh, -2, -1)) * (C ** -0.5)   # C**-0.5 as in the module
        wei = jnp.where(tril, wei, -jnp.inf)
        wei = jax.nn.softmax(wei, axis=-1)
        heads.append(wei @ vh)
    cat = jnp.concatenate(heads, axis=-1)
    return cat @ w_proj + b_proj


if __name__ == "__main__":
    key = jax.random.PRNGKey(0)
    kx, kq, kk, kv, kp, kb = jax.random.split(key, 6)

    B, T, C = 2, block_size, n_embd
    x = jax.random.normal(kx, (B, T, C), dtype=jnp.float32)

    # "Linear(bias=False)"-style init; weights stored pre-transposed as (in, out).
    bound = 1.0 / jnp.sqrt(jnp.float32(C))
    w_q = jax.random.uniform(kq, (C, C), jnp.float32, -bound, bound)
    w_k = jax.random.uniform(kk, (C, C), jnp.float32, -bound, bound)
    w_v = jax.random.uniform(kv, (C, C), jnp.float32, -bound, bound)
    w_proj = jax.random.uniform(kp, (C, C), jnp.float32, -bound, bound)
    b_proj = jax.random.uniform(kb, (C,), jnp.float32, -bound, bound)

    # One-time parameter transform (scale folding, bias reshape) — init-time only.
    w_qkv_p, w_proj_p, b_proj_p = prepare_mha_params(w_q, w_k, w_v, w_proj, b_proj)

    out = mha_forward(x, w_qkv_p, w_proj_p, b_proj_p)
    out = jax.block_until_ready(out)

    ref = mha_reference(x, w_q, w_k, w_v, w_proj, b_proj)
    assert out.shape == (B, T, C)
    # Softmax now uses an exact divide; the remaining delta is only MXU-vs-XLA matmul
    # rounding at default precision.
    err = jnp.max(jnp.abs(out - ref))
    assert jnp.allclose(out, ref, atol=2e-3, rtol=2e-3), f"max abs err {err}"

    print("KERNEL_OK")
</pallas_src>

<mosaic_0001>
module attributes {stable_mosaic.version = 11 : i64} {
  func.func @mha_kernel(%arg0: i32, %arg1: memref<64x64xf32, #tpu.memory_space<vmem>>, %arg2: memref<64x192xf32, #tpu.memory_space<vmem>>, %arg3: memref<64x64xf32, #tpu.memory_space<vmem>>, %arg4: memref<1x64xf32, #tpu.memory_space<vmem>>, %arg5: memref<64x64xf32, #tpu.memory_space<vmem>>) attributes {dimension_semantics = [#tpu.dimension_semantics<arbitrary>], iteration_bounds = array<i64: 1>, scalar_prefetch = 0 : i64, scratch_operands = 0 : i64, tpu.core_type = #tpu.core_type<tc>, window_params = [{pipeline_mode = #tpu.pipeline_mode<synchronous>, transform_indices = @transform_0, window_bounds = array<i64: 64, 64>}, {pipeline_mode = #tpu.pipeline_mode<synchronous>, transform_indices = @transform_1, window_bounds = array<i64: 64, 192>}, {pipeline_mode = #tpu.pipeline_mode<synchronous>, transform_indices = @transform_2, window_bounds = array<i64: 64, 64>}, {pipeline_mode = #tpu.pipeline_mode<synchronous>, transform_indices = @transform_3, window_bounds = array<i64: 1, 64>}, {pipeline_mode = #tpu.pipeline_mode<synchronous>, transform_indices = @transform_4, window_bounds = array<i64: 64, 64>}]} {
    %c0 = arith.constant 0 : index
    %c0_0 = arith.constant 0 : index
    %0 = vector.load %arg1[%c0, %c0_0] : memref<64x64xf32, #tpu.memory_space<vmem>>, vector<64x64xf32>
    %c0_1 = arith.constant 0 : index
    %c0_2 = arith.constant 0 : index
    %1 = vector.load %arg2[%c0_1, %c0_2] : memref<64x192xf32, #tpu.memory_space<vmem>>, vector<64x192xf32>
    %cst = arith.constant dense<0.000000e+00> : vector<64x192xf32>
    %2 = tpu.matmul %0, %1, %cst {dimension_numbers = #tpu.dot_dimension_numbers<[1], [0], [0], [1], [0, 0, 1, 1], [], []>} : vector<64x64xf32>, vector<64x192xf32>, vector<64x192xf32> -> vector<64x192xf32>
    %3 = vector.extract_strided_slice %2 {offsets = [0, 0], sizes = [64, 64], strides = [1, 1]} : vector<64x192xf32> to vector<64x64xf32>
    %4 = vector.extract_strided_slice %2 {offsets = [0, 64], sizes = [64, 64], strides = [1, 1]} : vector<64x192xf32> to vector<64x64xf32>
    %5 = vector.extract_strided_slice %2 {offsets = [0, 128], sizes = [64, 64], strides = [1, 1]} : vector<64x192xf32> to vector<64x64xf32>
    %6 = tpu.iota {dimensions = array<i32: 0>} : vector<32x32xi32>
    %7 = tpu.iota {dimensions = array<i32: 1>} : vector<32x32xi32>
    %8 = arith.cmpi sge, %6, %7 : vector<32x32xi32>
    %cst_3 = arith.constant 0.000000e+00 : f32
    %cst_4 = arith.constant -1.000000e+30 : f32
    %9 = vector.broadcast %cst_3 : f32 to vector<32x32xf32>
    %10 = vector.broadcast %cst_4 : f32 to vector<32x32xf32>
    %11 = arith.select %8, %9, %10 : vector<32x32xi1>, vector<32x32xf32>
    %12 = vector.extract_strided_slice %3 {offsets = [0, 0], sizes = [64, 16], strides = [1, 1]} : vector<64x64xf32> to vector<64x16xf32>
    %13 = vector.shape_cast %12 : vector<64x16xf32> to vector<2x32x16xf32>
    %14 = vector.extract_strided_slice %4 {offsets = [0, 0], sizes = [64, 16], strides = [1, 1]} : vector<64x64xf32> to vector<64x16xf32>
    %15 = vector.shape_cast %14 : vector<64x16xf32> to vector<2x32x16xf32>
    %16 = vector.extract_strided_slice %5 {offsets = [0, 0], sizes = [64, 16], strides = [1, 1]} : vector<64x64xf32> to vector<64x16xf32>
    %17 = vector.shape_cast %16 : vector<64x16xf32> to vector<2x32x16xf32>
    "tpu.trace_start"() <{level = 10 : i32, message = "btd,bsd->bts"}> : () -> ()
    %cst_5 = arith.constant dense<0.000000e+00> : vector<2x32x32xf32>
    %18 = tpu.matmul %13, %15, %cst_5 {dimension_numbers = #tpu.dot_dimension_numbers<[2], [2], [1], [1], [0, 0, 0, 1, 1, 1], [0], [0]>} : vector<2x32x16xf32>, vector<2x32x16xf32>, vector<2x32x32xf32> -> vector<2x32x32xf32>
    "tpu.trace_stop"() : () -> ()
    %19 = vector.shape_cast %11 : vector<32x32xf32> to vector<1x32x32xf32>
    %20 = vector.broadcast %19 : vector<1x32x32xf32> to vector<2x32x32xf32>
    %21 = arith.addf %18, %20 : vector<2x32x32xf32>
    %cst_6 = arith.constant dense<0xFF800000> : vector<2x32xf32>
    %22 = vector.multi_reduction <maximumf>, %21, %cst_6 [2] : vector<2x32x32xf32> to vector<2x32xf32>
    %23 = vector.shape_cast %22 : vector<2x32xf32> to vector<2x32x1xf32>
    %24 = vector.broadcast %23 : vector<2x32x1xf32> to vector<2x32x32xf32>
    %25 = arith.subf %21, %24 : vector<2x32x32xf32>
    %26 = math.exp %25 : vector<2x32x32xf32>
    %cst_7 = arith.constant dense<0.000000e+00> : vector<2x32xf32>
    %27 = vector.multi_reduction <add>, %26, %cst_7 [2] : vector<2x32x32xf32> to vector<2x32xf32>
    %28 = vector.shape_cast %27 : vector<2x32xf32> to vector<2x32x1xf32>
    %29 = vector.broadcast %28 : vector<2x32x1xf32> to vector<2x32x32xf32>
    %30 = arith.divf %26, %29 : vector<2x32x32xf32>
    "tpu.trace_start"() <{level = 10 : i32, message = "bts,bsd->btd"}> : () -> ()
    %cst_8 = arith.constant dense<0.000000e+00> : vector<2x32x16xf32>
    %31 = tpu.matmul %30, %17, %cst_8 {dimension_numbers = #tpu.dot_dimension_numbers<[2], [1], [1], [2], [0, 0, 0, 1, 1, 2], [0], [0]>} : vector<2x32x32xf32>, vector<2x32x16xf32>, vector<2x32x16xf32> -> vector<2x32x16xf32>
    "tpu.trace_stop"() : () -> ()
    %32 = vector.shape_cast %31 : vector<2x32x16xf32> to vector<64x16xf32>
    %33 = vector.extract_strided_slice %3 {offsets = [0, 16], sizes = [64, 16], strides = [1, 1]} : vector<64x64xf32> to vector<64x16xf32>
    %34 = vector.shape_cast %33 : vector<64x16xf32> to vector<2x32x16xf32>
    %35 = vector.extract_strided_slice %4 {offsets = [0, 16], sizes = [64, 16], strides = [1, 1]} : vector<64x64xf32> to vector<64x16xf32>
    %36 = vector.shape_cast %35 : vector<64x16xf32> to vector<2x32x16xf32>
    %37 = vector.extract_strided_slice %5 {offsets = [0, 16], sizes = [64, 16], strides = [1, 1]} : vector<64x64xf32> to vector<64x16xf32>
    %38 = vector.shape_cast %37 : vector<64x16xf32> to vector<2x32x16xf32>
    "tpu.trace_start"() <{level = 10 : i32, message = "btd,bsd->bts"}> : () -> ()
    %cst_9 = arith.constant dense<0.000000e+00> : vector<2x32x32xf32>
    %39 = tpu.matmul %34, %36, %cst_9 {dimension_numbers = #tpu.dot_dimension_numbers<[2], [2], [1], [1], [0, 0, 0, 1, 1, 1], [0], [0]>} : vector<2x32x16xf32>, vector<2x32x16xf32>, vector<2x32x32xf32> -> vector<2x32x32xf32>
    "tpu.trace_stop"() : () -> ()
    %40 = vector.shape_cast %11 : vector<32x32xf32> to vector<1x32x32xf32>
    %41 = vector.broadcast %40 : vector<1x32x32xf32> to vector<2x32x32xf32>
    %42 = arith.addf %39, %41 : vector<2x32x32xf32>
    %cst_10 = arith.constant dense<0xFF800000> : vector<2x32xf32>
    %43 = vector.multi_reduction <maximumf>, %42, %cst_10 [2] : vector<2x32x32xf32> to vector<2x32xf32>
    %44 = vector.shape_cast %43 : vector<2x32xf32> to vector<2x32x1xf32>
    %45 = vector.broadcast %44 : vector<2x32x1xf32> to vector<2x32x32xf32>
    %46 = arith.subf %42, %45 : vector<2x32x32xf32>
    %47 = math.exp %46 : vector<2x32x32xf32>
    %cst_11 = arith.constant dense<0.000000e+00> : vector<2x32xf32>
    %48 = vector.multi_reduction <add>, %47, %cst_11 [2] : vector<2x32x32xf32> to vector<2x32xf32>
    %49 = vector.shape_cast %48 : vector<2x32xf32> to vector<2x32x1xf32>
    %50 = vector.broadcast %49 : vector<2x32x1xf32> to vector<2x32x32xf32>
    %51 = arith.divf %47, %50 : vector<2x32x32xf32>
    "tpu.trace_start"() <{level = 10 : i32, message = "bts,bsd->btd"}> : () -> ()
    %cst_12 = arith.constant dense<0.000000e+00> : vector<2x32x16xf32>
    %52 = tpu.matmul %51, %38, %cst_12 {dimension_numbers = #tpu.dot_dimension_numbers<[2], [1], [1], [2], [0, 0, 0, 1, 1, 2], [0], [0]>} : vector<2x32x32xf32>, vector<2x32x16xf32>, vector<2x32x16xf32> -> vector<2x32x16xf32>
    "tpu.trace_stop"() : () -> ()
    %53 = vector.shape_cast %52 : vector<2x32x16xf32> to vector<64x16xf32>
    %54 = vector.extract_strided_slice %3 {offsets = [0, 32], sizes = [64, 16], strides = [1, 1]} : vector<64x64xf32> to vector<64x16xf32>
    %55 = vector.shape_cast %54 : vector<64x16xf32> to vector<2x32x16xf32>
    %56 = vector.extract_strided_slice %4 {offsets = [0, 32], sizes = [64, 16], strides = [1, 1]} : vector<64x64xf32> to vector<64x16xf32>
    %57 = vector.shape_cast %56 : vector<64x16xf32> to vector<2x32x16xf32>
    %58 = vector.extract_strided_slice %5 {offsets = [0, 32], sizes = [64, 16], strides = [1, 1]} : vector<64x64xf32> to vector<64x16xf32>
    %59 = vector.shape_cast %58 : vector<64x16xf32> to vector<2x32x16xf32>
    "tpu.trace_start"() <{level = 10 : i32, message = "btd,bsd->bts"}> : () -> ()
    %cst_13 = arith.constant dense<0.000000e+00> : vector<2x32x32xf32>
    %60 = tpu.matmul %55, %57, %cst_13 {dimension_numbers = #tpu.dot_dimension_numbers<[2], [2], [1], [1], [0, 0, 0, 1, 1, 1], [0], [0]>} : vector<2x32x16xf32>, vector<2x32x16xf32>, vector<2x32x32xf32> -> vector<2x32x32xf32>
    "tpu.trace_stop"() : () -> ()
    %61 = vector.shape_cast %11 : vector<32x32xf32> to vector<1x32x32xf32>
    %62 = vector.broadcast %61 : vector<1x32x32xf32> to vector<2x32x32xf32>
    %63 = arith.addf %60, %62 : vector<2x32x32xf32>
    %cst_14 = arith.constant dense<0xFF800000> : vector<2x32xf32>
    %64 = vector.multi_reduction <maximumf>, %63, %cst_14 [2] : vector<2x32x32xf32> to vector<2x32xf32>
    %65 = vector.shape_cast %64 : vector<2x32xf32> to vector<2x32x1xf32>
    %66 = vector.broadcast %65 : vector<2x32x1xf32> to vector<2x32x32xf32>
    %67 = arith.subf %63, %66 : vector<2x32x32xf32>
    %68 = math.exp %67 : vector<2x32x32xf32>
    %cst_15 = arith.constant dense<0.000000e+00> : vector<2x32xf32>
    %69 = vector.multi_reduction <add>, %68, %cst_15 [2] : vector<2x32x32xf32> to vector<2x32xf32>
    %70 = vector.shape_cast %69 : vector<2x32xf32> to vector<2x32x1xf32>
    %71 = vector.broadcast %70 : vector<2x32x1xf32> to vector<2x32x32xf32>
    %72 = arith.divf %68, %71 : vector<2x32x32xf32>
    "tpu.trace_start"() <{level = 10 : i32, message = "bts,bsd->btd"}> : () -> ()
    %cst_16 = arith.constant dense<0.000000e+00> : vector<2x32x16xf32>
    %73 = tpu.matmul %72, %59, %cst_16 {dimension_numbers = #tpu.dot_dimension_numbers<[2], [1], [1], [2], [0, 0, 0, 1, 1, 2], [0], [0]>} : vector<2x32x32xf32>, vector<2x32x16xf32>, vector<2x32x16xf32> -> vector<2x32x16xf32>
    "tpu.trace_stop"() : () -> ()
    %74 = vector.shape_cast %73 : vector<2x32x16xf32> to vector<64x16xf32>
    %75 = vector.extract_strided_slice %3 {offsets = [0, 48], sizes = [64, 16], strides = [1, 1]} : vector<64x64xf32> to vector<64x16xf32>
    %76 = vector.shape_cast %75 : vector<64x16xf32> to vector<2x32x16xf32>
    %77 = vector.extract_strided_slice %4 {offsets = [0, 48], sizes = [64, 16], strides = [1, 1]} : vector<64x64xf32> to vector<64x16xf32>
    %78 = vector.shape_cast %77 : vector<64x16xf32> to vector<2x32x16xf32>
    %79 = vector.extract_strided_slice %5 {offsets = [0, 48], sizes = [64, 16], strides = [1, 1]} : vector<64x64xf32> to vector<64x16xf32>
    %80 = vector.shape_cast %79 : vector<64x16xf32> to vector<2x32x16xf32>
    "tpu.trace_start"() <{level = 10 : i32, message = "btd,bsd->bts"}> : () -> ()
    %cst_17 = arith.constant dense<0.000000e+00> : vector<2x32x32xf32>
    %81 = tpu.matmul %76, %78, %cst_17 {dimension_numbers = #tpu.dot_dimension_numbers<[2], [2], [1], [1], [0, 0, 0, 1, 1, 1], [0], [0]>} : vector<2x32x16xf32>, vector<2x32x16xf32>, vector<2x32x32xf32> -> vector<2x32x32xf32>
    "tpu.trace_stop"() : () -> ()
    %82 = vector.shape_cast %11 : vector<32x32xf32> to vector<1x32x32xf32>
    %83 = vector.broadcast %82 : vector<1x32x32xf32> to vector<2x32x32xf32>
    %84 = arith.addf %81, %83 : vector<2x32x32xf32>
    %cst_18 = arith.constant dense<0xFF800000> : vector<2x32xf32>
    %85 = vector.multi_reduction <maximumf>, %84, %cst_18 [2] : vector<2x32x32xf32> to vector<2x32xf32>
    %86 = vector.shape_cast %85 : vector<2x32xf32> to vector<2x32x1xf32>
    %87 = vector.broadcast %86 : vector<2x32x1xf32> to vector<2x32x32xf32>
    %88 = arith.subf %84, %87 : vector<2x32x32xf32>
    %89 = math.exp %88 : vector<2x32x32xf32>
    %cst_19 = arith.constant dense<0.000000e+00> : vector<2x32xf32>
    %90 = vector.multi_reduction <add>, %89, %cst_19 [2] : vector<2x32x32xf32> to vector<2x32xf32>
    %91 = vector.shape_cast %90 : vector<2x32xf32> to vector<2x32x1xf32>
    %92 = vector.broadcast %91 : vector<2x32x1xf32> to vector<2x32x32xf32>
    %93 = arith.divf %89, %92 : vector<2x32x32xf32>
    "tpu.trace_start"() <{level = 10 : i32, message = "bts,bsd->btd"}> : () -> ()
    %cst_20 = arith.constant dense<0.000000e+00> : vector<2x32x16xf32>
    %94 = tpu.matmul %93, %80, %cst_20 {dimension_numbers = #tpu.dot_dimension_numbers<[2], [1], [1], [2], [0, 0, 0, 1, 1, 2], [0], [0]>} : vector<2x32x32xf32>, vector<2x32x16xf32>, vector<2x32x16xf32> -> vector<2x32x16xf32>
    "tpu.trace_stop"() : () -> ()
    %95 = vector.shape_cast %94 : vector<2x32x16xf32> to vector<64x16xf32>
    %96 = tpu.concatenate %32, %53, %74, %95 in 1 : vector<64x16xf32>, vector<64x16xf32>, vector<64x16xf32>, vector<64x16xf32> -> vector<64x64xf32>
    %c0_21 = arith.constant 0 : index
    %c0_22 = arith.constant 0 : index
    %97 = vector.load %arg3[%c0_21, %c0_22] : memref<64x64xf32, #tpu.memory_space<vmem>>, vector<64x64xf32>
    %cst_23 = arith.constant dense<0.000000e+00> : vector<64x64xf32>
    %98 = tpu.matmul %96, %97, %cst_23 {dimension_numbers = #tpu.dot_dimension_numbers<[1], [0], [0], [1], [0, 0, 1, 1], [], []>} : vector<64x64xf32>, vector<64x64xf32>, vector<64x64xf32> -> vector<64x64xf32>
    %c0_24 = arith.constant 0 : index
    %c0_25 = arith.constant 0 : index
    %99 = vector.load %arg4[%c0_24, %c0_25] : memref<1x64xf32, #tpu.memory_space<vmem>>, vector<1x64xf32>
    %100 = vector.broadcast %99 : vector<1x64xf32> to vector<64x64xf32>
    %101 = arith.addf %98, %100 : vector<64x64xf32>
    %c0_26 = arith.constant 0 : index
    %c0_27 = arith.constant 0 : index
    %102 = vector.load %arg5[%c0_26, %c0_27] : memref<64x64xf32, #tpu.memory_space<vmem>>, vector<64x64xf32>
    tpu.vector_store %arg5[%c0_26, %c0_27], %101 {strides = array<i32>} : memref<64x64xf32, #tpu.memory_space<vmem>>, vector<64x64xf32>,
    return
  }
  func.func @transform_0(%arg0: i32) -> (i32, i32) {
    %c0_i32 = arith.constant 0 : i32
    %c0_i32_0 = arith.constant 0 : i32
    %c0_i32_1 = arith.constant 0 : i32
    return %c0_i32, %c0_i32_0 : i32, i32
  }
  func.func @transform_1(%arg0: i32) -> (i32, i32) {
    %c0_i32 = arith.constant 0 : i32
    %c0_i32_0 = arith.constant 0 : i32
    %c0_i32_1 = arith.constant 0 : i32
    return %c0_i32, %c0_i32_0 : i32, i32
  }
  func.func @transform_2(%arg0: i32) -> (i32, i32) {
    %c0_i32 = arith.constant 0 : i32
    %c0_i32_0 = arith.constant 0 : i32
    %c0_i32_1 = arith.constant 0 : i32
    return %c0_i32, %c0_i32_0 : i32, i32
  }
  func.func @transform_3(%arg0: i32) -> (i32, i32) {
    %c0_i32 = arith.constant 0 : i32
    %c0_i32_0 = arith.constant 0 : i32
    %c0_i32_1 = arith.constant 0 : i32
    return %c0_i32, %c0_i32_0 : i32, i32
  }
  func.func @transform_4(%arg0: i32) -> (i32, i32) {
    %c0_i32 = arith.constant 0 : i32
    %c0_i32_0 = arith.constant 0 : i32
    %c0_i32_1 = arith.constant 0 : i32
    return %c0_i32, %c0_i32_0 : i32, i32
  }
}

</mosaic_0001>

<llo_original>
// kernel: tpu_custom_call.1
$region0: #{tpu_custom_call.1}
  #allocation0 [shape = 'u32[]', space=smem, size = 0x4, offset = 0x4, fixed_abs, tag = 'smem constant byte address 0x4 - core index']
  #allocation1 [shape = 'u32[72,128]{1,0:T(1,128)}', space=vmem, size = 0x9000, scoped, tag = 'internal scratch']
  %s0 = inlined_call_operand.hbm [shape: f32[64,64], index: 0, kind: input, shape index: {}]
  %s1 = inlined_call_operand.hbm [shape: f32[64,192], index: 1, kind: input, shape index: {}]
  %s2 = inlined_call_operand.hbm [shape: f32[64,64], index: 2, kind: input, shape index: {}]
  %s3 = inlined_call_operand.vmem [shape: f32[1,64], index: 3, kind: input, shape index: {}]
  %s4 = inlined_call_operand.hbm [shape: f32[64,64], index: 4, kind: output, shape index: {}]
  %s5 = sld [smem:[#allocation0]]
  $region38: #{tpu_custom_call.1} parent=0
    _
  %s7 = ssub.s32 1, %s5
  %s8 = scalar_select 0, %s7, %s5
  $region1: #{tpu_custom_call.1} parent=0
    #allocation2 [shape = 'u8[32768]{0}', space=vmem, size = 0x8000, scoped, tag = 'input window, operand 0, single buffered']
    #allocation3 [shape = 's32[1]{0}', space=sflag, size = 0x4, scoped, tag = 'scoped memory for tpu_custom_call.1']
    #allocation4 [shape = 's32[1]{0}', space=sflag, size = 0x4, scoped, tag = 'scoped memory for tpu_custom_call.1']
    #allocation5 [shape = 'u8[65536]{0}', space=vmem, size = 0x10000, scoped, tag = 'input window, operand 1, single buffered']
    #allocation6 [shape = 's32[1]{0}', space=sflag, size = 0x4, scoped, tag = 'scoped memory for tpu_custom_call.1']
    #allocation7 [shape = 'u8[32768]{0}', space=vmem, size = 0x8000, scoped, tag = 'input window, operand 2, single buffered']
    #allocation8 [shape = 'u8[32768]{0}', space=vmem, size = 0x8000, scoped, tag = 'output window, operand 0, single buffered']
    %9 = vsyncpa [#allocation3], 0
    %10 = vsyncpa [#allocation6], 0
    %11 = vsyncpa [#allocation4], 0
    // Predicated region
    $region2: #{tpu_custom_call.1} parent=1 // pred_check
      _
    $region3: #{tpu_custom_call.1} parent=1 // pred_check_branch
      %13 = sbr.rel (0) target = $region5
    $region4: #{tpu_custom_call.1} parent=1 // pred_region
      %15 = vsyncadd [#allocation3], 0
      %s16 = sshll.u32 %s0, 4
      %s17 = int_to_ptr.hbm [resolvable:$true] %s16
      %s18 = sshll.u32 [#allocation2], 4
      %s19 = int_to_ptr.vmem [resolvable:$true] %s18
      %24 = dma.hbm_to_vmem [thread:$0]  %s17, 1024, %s19, [#allocation3], 128, 128, 8
    $region5: #{tpu_custom_call.1} parent=1 // pred_fallthru
      _
    // Predicated region
    $region6: #{tpu_custom_call.1} parent=1 // pred_check
      _
    $region7: #{tpu_custom_call.1} parent=1 // pred_check_branch
      %26 = sbr.rel (0) target = $region9
    $region8: #{tpu_custom_call.1} parent=1 // pred_region
      %28 = vsyncadd [#allocation6], 0
      %s29 = sshll.u32 %s1, 4
      %s30 = int_to_ptr.hbm [resolvable:$true] %s29
      %s31 = sshll.u32 [#allocation5], 4
      %s32 = int_to_ptr.vmem [resolvable:$true] %s31
      %37 = dma.hbm_to_vmem [thread:$0]  %s30, 2048, %s32, [#allocation6], 256, 256, 16
    $region9: #{tpu_custom_call.1} parent=1 // pred_fallthru
      _
    // Predicated region
    $region10: #{tpu_custom_call.1} parent=1 // pred_check
      _
    $region11: #{tpu_custom_call.1} parent=1 // pred_check_branch
      %39 = sbr.rel (0) target = $region13
    $region12: #{tpu_custom_call.1} parent=1 // pred_region
      %41 = vsyncadd [#allocation6], 0
      %s42 = sshll.u32 %s2, 4
      %s43 = int_to_ptr.hbm [resolvable:$true] %s42
      %s44 = sshll.u32 [#allocation7], 4
      %s45 = int_to_ptr.vmem [resolvable:$true] %s44
      %50 = dma.hbm_to_vmem [thread:$0]  %s43, 1024, %s45, [#allocation6], 128, 128, 8
    $region13: #{tpu_custom_call.1} parent=1 // pred_fallthru
      _
    // Predicated region
    $region14: #{tpu_custom_call.1} parent=1 // pred_check
      _
    $region15: #{tpu_custom_call.1} parent=1 // pred_check_branch
      %52 = sbr.rel (0) target = $region17
    $region16: #{tpu_custom_call.1} parent=1 // pred_region
      _
    $region17: #{tpu_custom_call.1} parent=1 // pred_fallthru
      _
    // Predicated region
    $region18: #{tpu_custom_call.1} parent=1 // pred_check
      _
    $region19: #{tpu_custom_call.1} parent=1 // pred_check_branch
      %54 = sbr.rel (0) target = $region21
    $region20: #{tpu_custom_call.1} parent=1 // pred_region
      %56 = dma.done [#allocation3], 1024
    $region21: #{tpu_custom_call.1} parent=1 // pred_fallthru
      _
    // Predicated region
    $region22: #{tpu_custom_call.1} parent=1 // pred_check
      _
    $region23: #{tpu_custom_call.1} parent=1 // pred_check_branch
      %58 = sbr.rel (0) target = $region25
    $region24: #{tpu_custom_call.1} parent=1 // pred_region
      %60 = dma.done [#allocation6], 2048
    $region25: #{tpu_custom_call.1} parent=1 // pred_fallthru
      _
    // Predicated region
    $region26: #{tpu_custom_call.1} parent=1 // pred_check
      _
    $region27: #{tpu_custom_call.1} parent=1 // pred_check_branch
      %62 = sbr.rel (0) target = $region29
    $region28: #{tpu_custom_call.1} parent=1 // pred_region
      %64 = dma.done [#allocation6], 1024
    $region29: #{tpu_custom_call.1} parent=1 // pred_fallthru
      _
    %v65 = vld [vmem:[#allocation2] sm:$0xff]
    %v66 = vld [vmem:[#allocation2 + $0x8] sm:$0xff]
    %v67 = vld [vmem:[#allocation2 + $0x10] sm:$0xff]
    %v68 = vld [vmem:[#allocation2 + $0x18] sm:$0xff]
    %v69 = vld [vmem:[#allocation2 + $0x20] sm:$0xff]
    %v70 = vld [vmem:[#allocation2 + $0x28] sm:$0xff]
    %v71 = vld [vmem:[#allocation2 + $0x30] sm:$0xff]
    %v72 = vld [vmem:[#allocation2 + $0x38] sm:$0xff]
    %v73 = vld [vmem:[#allocation5] sm:$0xff]
    %v74 = vld [vmem:[#allocation5 + $0x8] sm:$0xff]
    %v75 = vld [vmem:[#allocation5 + $0x10] sm:$0xff]
    %v76 = vld [vmem:[#allocation5 + $0x18] sm:$0xff]
    %v77 = vld [vmem:[#allocation5 + $0x20] sm:$0xff]
    %v78 = vld [vmem:[#allocation5 + $0x28] sm:$0xff]
    %v79 = vld [vmem:[#allocation5 + $0x30] sm:$0xff]
    %v80 = vld [vmem:[#allocation5 + $0x38] sm:$0xff]
    %v81 = vld [vmem:[#allocation5 + $0x40] sm:$0xff]
    %v82 = vld [vmem:[#allocation5 + $0x48] sm:$0xff]
    %v83 = vld [vmem:[#allocation5 + $0x50] sm:$0xff]
    %v84 = vld [vmem:[#allocation5 + $0x58] sm:$0xff]
    %v85 = vld [vmem:[#allocation5 + $0x60] sm:$0xff]
    %v86 = vld [vmem:[#allocation5 + $0x68] sm:$0xff]
    %v87 = vld [vmem:[#allocation5 + $0x70] sm:$0xff]
    %v88 = vld [vmem:[#allocation5 + $0x78] sm:$0xff]
    %vm89 = vcmask 523264
    %v91 = vsel %vm89, %v65, 0
    %v94 = vsel %vm89, %v66, 0
    %v97 = vsel %vm89, %v67, 0
    %v100 = vsel %vm89, %v68, 0
    %v103 = vsel %vm89, %v69, 0
    %v106 = vsel %vm89, %v70, 0
    %v109 = vsel %vm89, %v71, 0
    %v112 = vsel %vm89, %v72, 0
    %114 = vmatpush.msra.mxu0 0.0
    %115 = vmatpush.msra.mxu0 0.0
    %116 = vmatpush.msra.mxu0 0.0
    %117 = vmatpush.msra.mxu0 0.0
    %118 = vmatpush.msra.mxu0 0.0
    %119 = vmatpush.msra.mxu0 0.0
    %120 = vmatpush.msra.mxu0 0.0
    %121 = vmatpush.msra.mxu0 0.0
    %122 = vmatpush.msra.mxu0 %v87
    %123 = vmatpush.msra.mxu0 %v85
    %124 = vmatpush.msra.mxu0 %v83
    %125 = vmatpush.msra.mxu0 %v81
    %126 = vmatpush.msra.mxu0 %v79
    %127 = vmatpush.msra.mxu0 %v77
    %128 = vmatpush.msra.mxu0 %v75
    %129 = vmatpush.msra.mxu0 %v73
    %130 = vmatmul.f32.gmra.mxu0 %v91
    %v131 = vpop.f32.mrf.mxu0
    %v132 = vadd.f32 0.0, %v131
    %133 = vmatmul.f32.gmra.mxu0 %v94
    %v134 = vpop.f32.mrf.mxu0
    %v135 = vadd.f32 0.0, %v134
    %136 = vmatmul.f32.gmra.mxu0 %v97
    %v137 = vpop.f32.mrf.mxu0
    %v138 = vadd.f32 0.0, %v137
    %139 = vmatmul.f32.gmra.mxu0 %v100
    %v140 = vpop.f32.mrf.mxu0
    %v141 = vadd.f32 0.0, %v140
    %142 = vmatmul.f32.gmra.mxu0 %v103
    %v143 = vpop.f32.mrf.mxu0
    %v144 = vadd.f32 0.0, %v143
    %145 = vmatmul.f32.gmra.mxu0 %v106
    %v146 = vpop.f32.mrf.mxu0
    %v147 = vadd.f32 0.0, %v146
    %148 = vmatmul.f32.gmra.mxu0 %v109
    %v149 = vpop.f32.mrf.mxu0
    %v150 = vadd.f32 0.0, %v149
    %151 = vmatmul.f32.gmra.mxu0 %v112
    %v152 = vpop.f32.mrf.mxu0
    %v153 = vadd.f32 0.0, %v152
    %154 = vdwg.mxu0
    %155 = vmatpush.msra.mxu0 0.0
    %156 = vmatpush.msra.mxu0 0.0
    %157 = vmatpush.msra.mxu0 0.0
    %158 = vmatpush.msra.mxu0 0.0
    %159 = vmatpush.msra.mxu0 0.0
    %160 = vmatpush.msra.mxu0 0.0
    %161 = vmatpush.msra.mxu0 0.0
    %162 = vmatpush.msra.mxu0 0.0
    %163 = vmatpush.msra.mxu0 %v88
    %164 = vmatpush.msra.mxu0 %v86
    %165 = vmatpush.msra.mxu0 %v84
    %166 = vmatpush.msra.mxu0 %v82
    %167 = vmatpush.msra.mxu0 %v80
    %168 = vmatpush.msra.mxu0 %v78
    %169 = vmatpush.msra.mxu0 %v76
    %170 = vmatpush.msra.mxu0 %v74
    %171 = vmatmul.f32.gmra.mxu0 %v91
    %v172 = vpop.f32.mrf.mxu0
    %v173 = vadd.f32 0.0, %v172
    %174 = vmatmul.f32.gmra.mxu0 %v94
    %v175 = vpop.f32.mrf.mxu0
    %v176 = vadd.f32 0.0, %v175
    %177 = vmatmul.f32.gmra.mxu0 %v97
    %v178 = vpop.f32.mrf.mxu0
    %v179 = vadd.f32 0.0, %v178
    %180 = vmatmul.f32.gmra.mxu0 %v100
    %v181 = vpop.f32.mrf.mxu0
    %v182 = vadd.f32 0.0, %v181
    %183 = vmatmul.f32.gmra.mxu0 %v103
    %v184 = vpop.f32.mrf.mxu0
    %v185 = vadd.f32 0.0, %v184
    %186 = vmatmul.f32.gmra.mxu0 %v106
    %v187 = vpop.f32.mrf.mxu0
    %v188 = vadd.f32 0.0, %v187
    %189 = vmatmul.f32.gmra.mxu0 %v109
    %v190 = vpop.f32.mrf.mxu0
    %v191 = vadd.f32 0.0, %v190
    %192 = vmatmul.f32.gmra.mxu0 %v112
    %v193 = vpop.f32.mrf.mxu0
    %v194 = vadd.f32 0.0, %v193
    %195 = vdwg.mxu0
    %v196 = vlaneseq
    %v197 = vshrl.u32 %v196, 7
    %v198 = vadd.s32 %v197, 8
    %v199 = vadd.s32 %v197, 16
    %v200 = vadd.s32 %v197, 24
    %v201 = vlaneseq
    %v202 = vand.u32 %v201, 127
    %vm203 = vcmp.ge.s32.totalorder %v197, %v202
    %vm204 = vcmp.ge.s32.totalorder %v198, %v202
    %vm205 = vcmp.ge.s32.totalorder %v199, %v202
    %vm206 = vcmp.ge.s32.totalorder %v200, %v202
    %v207 = vsel %vm203, 0.0, -1e+30
    %v208 = vsel %vm204, 0.0, -1e+30
    %v209 = vsel %vm205, 0.0, -1e+30
    %v210 = vsel %vm206, 0.0, -1e+30
    %215 = vrot.lane.b32.xlu0 %v132, 64
    %v216 = vpop.permute.xlu0 %215
    %217 = vrot.lane.b32.xlu0 %v135, 64
    %v218 = vpop.permute.xlu0 %217
    %219 = vrot.lane.b32.xlu0 %v138, 64
    %v220 = vpop.permute.xlu0 %219
    %221 = vrot.lane.b32.xlu0 %v141, 64
    %v222 = vpop.permute.xlu0 %221
    %vm223 = vcmask 130048
    %v224 = vsel %vm223, %v132, 0
    %v226 = vsel %vm223, %v135, 0
    %v228 = vsel %vm223, %v138, 0
    %v230 = vsel %vm223, %v141, 0
    %v232 = vsel %vm223, %v216, 0
    %v234 = vsel %vm223, %v218, 0
    %v236 = vsel %vm223, %v220, 0
    %v238 = vsel %vm223, %v222, 0
    %240 = vmatpush.xpose.msra.mxu0 0.0
    %241 = vmatpush.xpose.msra.mxu0 0.0
    %242 = vmatpush.xpose.msra.mxu0 0.0
    %243 = vmatpush.xpose.msra.mxu0 0.0
    %244 = vmatpush.xpose.msra.mxu0 0.0
    %245 = vmatpush.xpose.msra.mxu0 0.0
    %246 = vmatpush.xpose.msra.mxu0 0.0
    %247 = vmatpush.xpose.msra.mxu0 0.0
    %248 = vmatpush.xpose.msra.mxu0 0.0
    %249 = vmatpush.xpose.msra.mxu0 0.0
    %250 = vmatpush.xpose.msra.mxu0 0.0
    %251 = vmatpush.xpose.msra.mxu0 0.0
    %252 = vmatpush.xpose.msra.mxu0 %v238
    %253 = vmatpush.xpose.msra.mxu0 %v236
    %254 = vmatpush.xpose.msra.mxu0 %v234
    %255 = vmatpush.xpose.msra.mxu0 %v232
    %256 = vmatmul.f32.gmra.mxu0 %v224
    %v257 = vpop.f32.mrf.mxu0
    %v258 = vadd.f32 %v207, %v257
    %259 = vmatmul.f32.gmra.mxu0 %v226
    %v260 = vpop.f32.mrf.mxu0
    %v261 = vadd.f32 %v208, %v260
    %262 = vmatmul.f32.gmra.mxu0 %v228
    %v263 = vpop.f32.mrf.mxu0
    %v264 = vadd.f32 %v209, %v263
    %265 = vmatmul.f32.gmra.mxu0 %v230
    %v266 = vpop.f32.mrf.mxu0
    %v267 = vadd.f32 %v210, %v266
    %268 = vdwg.mxu0
    %273 = vrot.lane.b32.xlu0 %v144, 64
    %v274 = vpop.permute.xlu0 %273
    %275 = vrot.lane.b32.xlu0 %v147, 64
    %v276 = vpop.permute.xlu0 %275
    %277 = vrot.lane.b32.xlu0 %v150, 64
    %v278 = vpop.permute.xlu0 %277
    %279 = vrot.lane.b32.xlu0 %v153, 64
    %v280 = vpop.permute.xlu0 %279
    %v281 = vsel %vm223, %v144, 0
    %v283 = vsel %vm223, %v147, 0
    %v285 = vsel %vm223, %v150, 0
    %v287 = vsel %vm223, %v153, 0
    %v289 = vsel %vm223, %v274, 0
    %v291 = vsel %vm223, %v276, 0
    %v293 = vsel %vm223, %v278, 0
    %v295 = vsel %vm223, %v280, 0
    %297 = vmatpush.xpose.msra.mxu0 0.0
    %298 = vmatpush.xpose.msra.mxu0 0.0
    %299 = vmatpush.xpose.msra.mxu0 0.0
    %300 = vmatpush.xpose.msra.mxu0 0.0
    %301 = vmatpush.xpose.msra.mxu0 0.0
    %302 = vmatpush.xpose.msra.mxu0 0.0
    %303 = vmatpush.xpose.msra.mxu0 0.0
    %304 = vmatpush.xpose.msra.mxu0 0.0
    %305 = vmatpush.xpose.msra.mxu0 0.0
    %306 = vmatpush.xpose.msra.mxu0 0.0
    %307 = vmatpush.xpose.msra.mxu0 0.0
    %308 = vmatpush.xpose.msra.mxu0 0.0
    %309 = vmatpush.xpose.msra.mxu0 %v295
    %310 = vmatpush.xpose.msra.mxu0 %v293
    %311 = vmatpush.xpose.msra.mxu0 %v291
    %312 = vmatpush.xpose.msra.mxu0 %v289
    %313 = vmatmul.f32.gmra.mxu0 %v281
    %v314 = vpop.f32.mrf.mxu0
    %v315 = vadd.f32 %v207, %v314
    %316 = vmatmul.f32.gmra.mxu0 %v283
    %v317 = vpop.f32.mrf.mxu0
    %v318 = vadd.f32 %v208, %v317
    %319 = vmatmul.f32.gmra.mxu0 %v285
    %v320 = vpop.f32.mrf.mxu0
    %v321 = vadd.f32 %v209, %v320
    %322 = vmatmul.f32.gmra.mxu0 %v287
    %v323 = vpop.f32.mrf.mxu0
    %v324 = vadd.f32 %v210, %v323
    %325 = vdwg.mxu0
    %vm326 = vcmask 261120
    %v327 = vsel %vm326, %v258, -inf
    %328 = vmax.xlane.f32.xlu0 %v327
    %v329 = vpop.xlane.xlu0 %328
    %v330 = vsel %vm326, %v261, -inf
    %331 = vmax.xlane.f32.xlu0 %v330
    %v332 = vpop.xlane.xlu0 %331
    %v333 = vsel %vm326, %v264, -inf
    %334 = vmax.xlane.f32.xlu0 %v333
    %v335 = vpop.xlane.xlu0 %334
    %v336 = vsel %vm326, %v267, -inf
    %337 = vmax.xlane.f32.xlu0 %v336
    %v338 = vpop.xlane.xlu0 %337
    %v339 = vsel %vm326, %v315, -inf
    %340 = vmax.xlane.f32.xlu0 %v339
    %v341 = vpop.xlane.xlu0 %340
    %v342 = vsel %vm326, %v318, -inf
    %343 = vmax.xlane.f32.xlu0 %v342
    %v344 = vpop.xlane.xlu0 %343
    %v345 = vsel %vm326, %v321, -inf
    %346 = vmax.xlane.f32.xlu0 %v345
    %v347 = vpop.xlane.xlu0 %346
    %v348 = vsel %vm326, %v324, -inf
    %349 = vmax.xlane.f32.xlu0 %v348
    %v350 = vpop.xlane.xlu0 %349
    %v351 = vsub.f32 %v258, %v329
    %v352 = vsub.f32 %v261, %v332
    %v353 = vsub.f32 %v264, %v335
    %v354 = vsub.f32 %v267, %v338
    %v355 = vsub.f32 %v315, %v341
    %v356 = vsub.f32 %v318, %v344
    %v357 = vsub.f32 %v321, %v347
    %v358 = vsub.f32 %v324, %v350
    %v359 = vmul.f32 %v351, 1.442695
    %v360 = vpow.pop %v359
    %v361 = vmul.f32 %v352, 1.442695
    %v362 = vpow.pop %v361
    %v363 = vmul.f32 %v353, 1.442695
    %v364 = vpow.pop %v363
    %v365 = vmul.f32 %v354, 1.442695
    %v366 = vpow.pop %v365
    %v367 = vmul.f32 %v355, 1.442695
    %v368 = vpow.pop %v367
    %v369 = vmul.f32 %v356, 1.442695
    %v370 = vpow.pop %v369
    %v371 = vmul.f32 %v357, 1.442695
    %v372 = vpow.pop %v371
    %v373 = vmul.f32 %v358, 1.442695
    %v374 = vpow.pop %v373
    %v375 = vsel %vm326, %v360, 0.0
    %376 = vadd.xlane.f32.xlu0 %v375
    %v377 = vpop.xlane.xlu0 %376
    %v378 = vsel %vm326, %v362, 0.0
    %379 = vadd.xlane.f32.xlu0 %v378
    %v380 = vpop.xlane.xlu0 %379
    %v381 = vsel %vm326, %v364, 0.0
    %382 = vadd.xlane.f32.xlu0 %v381
    %v383 = vpop.xlane.xlu0 %382
    %v384 = vsel %vm326, %v366, 0.0
    %385 = vadd.xlane.f32.xlu0 %v384
    %v386 = vpop.xlane.xlu0 %385
    %v387 = vsel %vm326, %v368, 0.0
    %388 = vadd.xlane.f32.xlu0 %v387
    %v389 = vpop.xlane.xlu0 %388
    %v390 = vsel %vm326, %v370, 0.0
    %391 = vadd.xlane.f32.xlu0 %v390
    %v392 = vpop.xlane.xlu0 %391
    %v393 = vsel %vm326, %v372, 0.0
    %394 = vadd.xlane.f32.xlu0 %v393
    %v395 = vpop.xlane.xlu0 %394
    %v396 = vsel %vm326, %v374, 0.0
    %397 = vadd.xlane.f32.xlu0 %v396
    %v398 = vpop.xlane.xlu0 %397
    %v399 = vrcp.pop %v377
    %v400 = vmul.f32 %v377, %v399
    %v401 = vsub.f32 1.0, %v400
    %v402 = vmul.f32 %v399, %v401
    %v403 = vadd.f32 %v399, %v402
    %vm404 = vweird.f32 %v377
    %vm405 = vweird.f32 %v399
    %vm406 = vmor %vm404, %vm405
    %v407 = vsel %vm406, %v399, %v403
    %v408 = vand.u32 2147483647, %v377
    %vm409 = vcmp.eq.f32.partialorder %v408, 8.507059e+37
    %v410 = vand.u32 %v377, 2147483648
    %v411 = vor.u32 1.1754944e-38, %v410
    %v412 = vsel %vm409, %v411, %v407
    %v413 = vmul.f32 %v360, %v412
    %v414 = vrcp.pop %v380
    %v415 = vmul.f32 %v380, %v414
    %v416 = vsub.f32 1.0, %v415
    %v417 = vmul.f32 %v414, %v416
    %v418 = vadd.f32 %v414, %v417
    %vm419 = vweird.f32 %v380
    %vm420 = vweird.f32 %v414
    %vm421 = vmor %vm419, %vm420
    %v422 = vsel %vm421, %v414, %v418
    %v423 = vand.u32 2147483647, %v380
    %vm424 = vcmp.eq.f32.partialorder %v423, 8.507059e+37
    %v425 = vand.u32 %v380, 2147483648
    %v426 = vor.u32 1.1754944e-38, %v425
    %v427 = vsel %vm424, %v426, %v422
    %v428 = vmul.f32 %v362, %v427
    %v429 = vrcp.pop %v383
    %v430 = vmul.f32 %v383, %v429
    %v431 = vsub.f32 1.0, %v430
    %v432 = vmul.f32 %v429, %v431
    %v433 = vadd.f32 %v429, %v432
    %vm434 = vweird.f32 %v383
    %vm435 = vweird.f32 %v429
    %vm436 = vmor %vm434, %vm435
    %v437 = vsel %vm436, %v429, %v433
    %v438 = vand.u32 2147483647, %v383
    %vm439 = vcmp.eq.f32.partialorder %v438, 8.507059e+37
    %v440 = vand.u32 %v383, 2147483648
    %v441 = vor.u32 1.1754944e-38, %v440
    %v442 = vsel %vm439, %v441, %v437
    %v443 = vmul.f32 %v364, %v442
    %v444 = vrcp.pop %v386
    %v445 = vmul.f32 %v386, %v444
    %v446 = vsub.f32 1.0, %v445
    %v447 = vmul.f32 %v444, %v446
    %v448 = vadd.f32 %v444, %v447
    %vm449 = vweird.f32 %v386
    %vm450 = vweird.f32 %v444
    %vm451 = vmor %vm449, %vm450
    %v452 = vsel %vm451, %v444, %v448
    %v453 = vand.u32 2147483647, %v386
    %vm454 = vcmp.eq.f32.partialorder %v453, 8.507059e+37
    %v455 = vand.u32 %v386, 2147483648
    %v456 = vor.u32 1.1754944e-38, %v455
    %v457 = vsel %vm454, %v456, %v452
    %v458 = vmul.f32 %v366, %v457
    %v459 = vrcp.pop %v389
    %v460 = vmul.f32 %v389, %v459
    %v461 = vsub.f32 1.0, %v460
    %v462 = vmul.f32 %v459, %v461
    %v463 = vadd.f32 %v459, %v462
    %vm464 = vweird.f32 %v389
    %vm465 = vweird.f32 %v459
    %vm466 = vmor %vm464, %vm465
    %v467 = vsel %vm466, %v459, %v463
    %v468 = vand.u32 2147483647, %v389
    %vm469 = vcmp.eq.f32.partialorder %v468, 8.507059e+37
    %v470 = vand.u32 %v389, 2147483648
    %v471 = vor.u32 1.1754944e-38, %v470
    %v472 = vsel %vm469, %v471, %v467
    %v473 = vmul.f32 %v368, %v472
    %v474 = vrcp.pop %v392
    %v475 = vmul.f32 %v392, %v474
    %v476 = vsub.f32 1.0, %v475
    %v477 = vmul.f32 %v474, %v476
    %v478 = vadd.f32 %v474, %v477
    %vm479 = vweird.f32 %v392
    %vm480 = vweird.f32 %v474
    %vm481 = vmor %vm479, %vm480
    %v482 = vsel %vm481, %v474, %v478
    %v483 = vand.u32 2147483647, %v392
    %vm484 = vcmp.eq.f32.partialorder %v483, 8.507059e+37
    %v485 = vand.u32 %v392, 2147483648
    %v486 = vor.u32 1.1754944e-38, %v485
    %v487 = vsel %vm484, %v486, %v482
    %v488 = vmul.f32 %v370, %v487
    %v489 = vrcp.pop %v395
    %v490 = vmul.f32 %v395, %v489
    %v491 = vsub.f32 1.0, %v490
    %v492 = vmul.f32 %v489, %v491
    %v493 = vadd.f32 %v489, %v492
    %vm494 = vweird.f32 %v395
    %vm495 = vweird.f32 %v489
    %vm496 = vmor %vm494, %vm495
    %v497 = vsel %vm496, %v489, %v493
    %v498 = vand.u32 2147483647, %v395
    %vm499 = vcmp.eq.f32.partialorder %v498, 8.507059e+37
    %v500 = vand.u32 %v395, 2147483648
    %v501 = vor.u32 1.1754944e-38, %v500
    %v502 = vsel %vm499, %v501, %v497
    %v503 = vmul.f32 %v372, %v502
    %v504 = vrcp.pop %v398
    %v505 = vmul.f32 %v398, %v504
    %v506 = vsub.f32 1.0, %v505
    %v507 = vmul.f32 %v504, %v506
    %v508 = vadd.f32 %v504, %v507
    %vm509 = vweird.f32 %v398
    %vm510 = vweird.f32 %v504
    %vm511 = vmor %vm509, %vm510
    %v512 = vsel %vm511, %v504, %v508
    %v513 = vand.u32 2147483647, %v398
    %vm514 = vcmp.eq.f32.partialorder %v513, 8.507059e+37
    %v515 = vand.u32 %v398, 2147483648
    %v516 = vor.u32 1.1754944e-38, %v515
    %v517 = vsel %vm514, %v516, %v512
    %v518 = vmul.f32 %v374, %v517
    %v520 = vsel %vm326, %v413, 0
    %v523 = vsel %vm326, %v428, 0
    %v526 = vsel %vm326, %v443, 0
    %v529 = vsel %vm326, %v458, 0
    %531 = vmatpush.msra.mxu0 0.0
    %532 = vmatpush.msra.mxu0 0.0
    %533 = vmatpush.msra.mxu0 0.0
    %534 = vmatpush.msra.mxu0 0.0
    %535 = vmatpush.msra.mxu0 0.0
    %536 = vmatpush.msra.mxu0 0.0
    %537 = vmatpush.msra.mxu0 0.0
    %538 = vmatpush.msra.mxu0 0.0
    %539 = vmatpush.msra.mxu0 0.0
    %540 = vmatpush.msra.mxu0 0.0
    %541 = vmatpush.msra.mxu0 0.0
    %542 = vmatpush.msra.mxu0 0.0
    %543 = vmatpush.msra.mxu0 %v182
    %544 = vmatpush.msra.mxu0 %v179
    %545 = vmatpush.msra.mxu0 %v176
    %546 = vmatpush.msra.mxu0 %v173
    %547 = vmatmul.f32.gmra.mxu0 %v520
    %v548 = vpop.f32.mrf.mxu0
    %v549 = vadd.f32 0.0, %v548
    %550 = vmatmul.f32.gmra.mxu0 %v523
    %v551 = vpop.f32.mrf.mxu0
    %v552 = vadd.f32 0.0, %v551
    %553 = vmatmul.f32.gmra.mxu0 %v526
    %v554 = vpop.f32.mrf.mxu0
    %v555 = vadd.f32 0.0, %v554
    %556 = vmatmul.f32.gmra.mxu0 %v529
    %v557 = vpop.f32.mrf.mxu0
    %v558 = vadd.f32 0.0, %v557
    %559 = vdwg.mxu0
    %v561 = vsel %vm326, %v473, 0
    %v564 = vsel %vm326, %v488, 0
    %v567 = vsel %vm326, %v503, 0
    %v570 = vsel %vm326, %v518, 0
    %572 = vmatpush.msra.mxu0 0.0
    %573 = vmatpush.msra.mxu0 0.0
    %574 = vmatpush.msra.mxu0 0.0
    %575 = vmatpush.msra.mxu0 0.0
    %576 = vmatpush.msra.mxu0 0.0
    %577 = vmatpush.msra.mxu0 0.0
    %578 = vmatpush.msra.mxu0 0.0
    %579 = vmatpush.msra.mxu0 0.0
    %580 = vmatpush.msra.mxu0 0.0
    %581 = vmatpush.msra.mxu0 0.0
    %582 = vmatpush.msra.mxu0 0.0
    %583 = vmatpush.msra.mxu0 0.0
    %584 = vmatpush.msra.mxu0 %v194
    %585 = vmatpush.msra.mxu0 %v191
    %586 = vmatpush.msra.mxu0 %v188
    %587 = vmatpush.msra.mxu0 %v185
    %588 = vmatmul.f32.gmra.mxu0 %v561
    %v589 = vpop.f32.mrf.mxu0
    %v590 = vadd.f32 0.0, %v589
    %591 = vmatmul.f32.gmra.mxu0 %v564
    %v592 = vpop.f32.mrf.mxu0
    %v593 = vadd.f32 0.0, %v592
    %594 = vmatmul.f32.gmra.mxu0 %v567
    %v595 = vpop.f32.mrf.mxu0
    %v596 = vadd.f32 0.0, %v595
    %597 = vmatmul.f32.gmra.mxu0 %v570
    %v598 = vpop.f32.mrf.mxu0
    %v599 = vadd.f32 0.0, %v598
    %600 = vdwg.mxu0
    %601 = vrot.lane.b32.xlu0 %v132, 112
    %v602 = vpop.permute.xlu0 %601
    %603 = vrot.lane.b32.xlu0 %v135, 112
    %v604 = vpop.permute.xlu0 %603
    %605 = vrot.lane.b32.xlu0 %v138, 112
    %v606 = vpop.permute.xlu0 %605
    %607 = vrot.lane.b32.xlu0 %v141, 112
    %v608 = vpop.permute.xlu0 %607
    %609 = vrot.lane.b32.xlu0 %v132, 48
    %v610 = vpop.permute.xlu0 %609
    %611 = vrot.lane.b32.xlu0 %v135, 48
    %v612 = vpop.permute.xlu0 %611
    %613 = vrot.lane.b32.xlu0 %v138, 48
    %v614 = vpop.permute.xlu0 %613
    %615 = vrot.lane.b32.xlu0 %v141, 48
    %v616 = vpop.permute.xlu0 %615
    %v617 = vsel %vm223, %v602, 0
    %v619 = vsel %vm223, %v604, 0
    %v621 = vsel %vm223, %v606, 0
    %v623 = vsel %vm223, %v608, 0
    %v625 = vsel %vm223, %v610, 0
    %v627 = vsel %vm223, %v612, 0
    %v629 = vsel %vm223, %v614, 0
    %v631 = vsel %vm223, %v616, 0
    %633 = vmatpush.xpose.msra.mxu0 0.0
    %634 = vmatpush.xpose.msra.mxu0 0.0
    %635 = vmatpush.xpose.msra.mxu0 0.0
    %636 = vmatpush.xpose.msra.mxu0 0.0
    %637 = vmatpush.xpose.msra.mxu0 0.0
    %638 = vmatpush.xpose.msra.mxu0 0.0
    %639 = vmatpush.xpose.msra.mxu0 0.0
    %640 = vmatpush.xpose.msra.mxu0 0.0
    %641 = vmatpush.xpose.msra.mxu0 0.0
    %642 = vmatpush.xpose.msra.mxu0 0.0
    %643 = vmatpush.xpose.msra.mxu0 0.0
    %644 = vmatpush.xpose.msra.mxu0 0.0
    %645 = vmatpush.xpose.msra.mxu0 %v631
    %646 = vmatpush.xpose.msra.mxu0 %v629
    %647 = vmatpush.xpose.msra.mxu0 %v627
    %648 = vmatpush.xpose.msra.mxu0 %v625
    %649 = vmatmul.f32.gmra.mxu0 %v617
    %v650 = vpop.f32.mrf.mxu0
    %v651 = vadd.f32 %v207, %v650
    %652 = vmatmul.f32.gmra.mxu0 %v619
    %v653 = vpop.f32.mrf.mxu0
    %v654 = vadd.f32 %v208, %v653
    %655 = vmatmul.f32.gmra.mxu0 %v621
    %v656 = vpop.f32.mrf.mxu0
    %v657 = vadd.f32 %v209, %v656
    %658 = vmatmul.f32.gmra.mxu0 %v623
    %v659 = vpop.f32.mrf.mxu0
    %v660 = vadd.f32 %v210, %v659
    %661 = vdwg.mxu0
    %662 = vrot.lane.b32.xlu0 %v144, 112
    %v663 = vpop.permute.xlu0 %662
    %664 = vrot.lane.b32.xlu0 %v147, 112
    %v665 = vpop.permute.xlu0 %664
    %666 = vrot.lane.b32.xlu0 %v150, 112
    %v667 = vpop.permute.xlu0 %666
    %668 = vrot.lane.b32.xlu0 %v153, 112
    %v669 = vpop.permute.xlu0 %668
    %670 = vrot.lane.b32.xlu0 %v144, 48
    %v671 = vpop.permute.xlu0 %670
    %672 = vrot.lane.b32.xlu0 %v147, 48
    %v673 = vpop.permute.xlu0 %672
    %674 = vrot.lane.b32.xlu0 %v150, 48
    %v675 = vpop.permute.xlu0 %674
    %676 = vrot.lane.b32.xlu0 %v153, 48
    %v677 = vpop.permute.xlu0 %676
    %v678 = vsel %vm223, %v663, 0
    %v680 = vsel %vm223, %v665, 0
    %v682 = vsel %vm223, %v667, 0
    %v684 = vsel %vm223, %v669, 0
    %v686 = vsel %vm223, %v671, 0
    %v688 = vsel %vm223, %v673, 0
    %v690 = vsel %vm223, %v675, 0
    %v692 = vsel %vm223, %v677, 0
    %694 = vmatpush.xpose.msra.mxu0 0.0
    %695 = vmatpush.xpose.msra.mxu0 0.0
    %696 = vmatpush.xpose.msra.mxu0 0.0
    %697 = vmatpush.xpose.msra.mxu0 0.0
    %698 = vmatpush.xpose.msra.mxu0 0.0
    %699 = vmatpush.xpose.msra.mxu0 0.0
    %700 = vmatpush.xpose.msra.mxu0 0.0
    %701 = vmatpush.xpose.msra.mxu0 0.0
    %702 = vmatpush.xpose.msra.mxu0 0.0
    %703 = vmatpush.xpose.msra.mxu0 0.0
    %704 = vmatpush.xpose.msra.mxu0 0.0
    %705 = vmatpush.xpose.msra.mxu0 0.0
    %706 = vmatpush.xpose.msra.mxu0 %v692
    %707 = vmatpush.xpose.msra.mxu0 %v690
    %708 = vmatpush.xpose.msra.mxu0 %v688
    %709 = vmatpush.xpose.msra.mxu0 %v686
    %710 = vmatmul.f32.gmra.mxu0 %v678
    %v711 = vpop.f32.mrf.mxu0
    %v712 = vadd.f32 %v207, %v711
    %713 = vmatmul.f32.gmra.mxu0 %v680
    %v714 = vpop.f32.mrf.mxu0
    %v715 = vadd.f32 %v208, %v714
    %716 = vmatmul.f32.gmra.mxu0 %v682
    %v717 = vpop.f32.mrf.mxu0
    %v718 = vadd.f32 %v209, %v717
    %719 = vmatmul.f32.gmra.mxu0 %v684
    %v720 = vpop.f32.mrf.mxu0
    %v721 = vadd.f32 %v210, %v720
    %722 = vdwg.mxu0
    %v723 = vsel %vm326, %v651, -inf
    %724 = vmax.xlane.f32.xlu0 %v723
    %v725 = vpop.xlane.xlu0 %724
    %v726 = vsel %vm326, %v654, -inf
    %727 = vmax.xlane.f32.xlu0 %v726
    %v728 = vpop.xlane.xlu0 %727
    %v729 = vsel %vm326, %v657, -inf
    %730 = vmax.xlane.f32.xlu0 %v729
    %v731 = vpop.xlane.xlu0 %730
    %v732 = vsel %vm326, %v660, -inf
    %733 = vmax.xlane.f32.xlu0 %v732
    %v734 = vpop.xlane.xlu0 %733
    %v735 = vsel %vm326, %v712, -inf
    %736 = vmax.xlane.f32.xlu0 %v735
    %v737 = vpop.xlane.xlu0 %736
    %v738 = vsel %vm326, %v715, -inf
    %739 = vmax.xlane.f32.xlu0 %v738
    %v740 = vpop.xlane.xlu0 %739
    %v741 = vsel %vm326, %v718, -inf
    %742 = vmax.xlane.f32.xlu0 %v741
    %v743 = vpop.xlane.xlu0 %742
    %v744 = vsel %vm326, %v721, -inf
    %745 = vmax.xlane.f32.xlu0 %v744
    %v746 = vpop.xlane.xlu0 %745
    %v747 = vsub.f32 %v651, %v725
    %v748 = vsub.f32 %v654, %v728
    %v749 = vsub.f32 %v657, %v731
    %v750 = vsub.f32 %v660, %v734
    %v751 = vsub.f32 %v712, %v737
    %v752 = vsub.f32 %v715, %v740
    %v753 = vsub.f32 %v718, %v743
    %v754 = vsub.f32 %v721, %v746
    %v755 = vmul.f32 %v747, 1.442695
    %v756 = vpow.pop %v755
    %v757 = vmul.f32 %v748, 1.442695
    %v758 = vpow.pop %v757
    %v759 = vmul.f32 %v749, 1.442695
    %v760 = vpow.pop %v759
    %v761 = vmul.f32 %v750, 1.442695
    %v762 = vpow.pop %v761
    %v763 = vmul.f32 %v751, 1.442695
    %v764 = vpow.pop %v763
    %v765 = vmul.f32 %v752, 1.442695
    %v766 = vpow.pop %v765
    %v767 = vmul.f32 %v753, 1.442695
    %v768 = vpow.pop %v767
    %v769 = vmul.f32 %v754, 1.442695
    %v770 = vpow.pop %v769
    %v771 = vsel %vm326, %v756, 0.0
    %772 = vadd.xlane.f32.xlu0 %v771
    %v773 = vpop.xlane.xlu0 %772
    %v774 = vsel %vm326, %v758, 0.0
    %775 = vadd.xlane.f32.xlu0 %v774
    %v776 = vpop.xlane.xlu0 %775
    %v777 = vsel %vm326, %v760, 0.0
    %778 = vadd.xlane.f32.xlu0 %v777
    %v779 = vpop.xlane.xlu0 %778
    %v780 = vsel %vm326, %v762, 0.0
    %781 = vadd.xlane.f32.xlu0 %v780
    %v782 = vpop.xlane.xlu0 %781
    %v783 = vsel %vm326, %v764, 0.0
    %784 = vadd.xlane.f32.xlu0 %v783
    %v785 = vpop.xlane.xlu0 %784
    %v786 = vsel %vm326, %v766, 0.0
    %787 = vadd.xlane.f32.xlu0 %v786
    %v788 = vpop.xlane.xlu0 %787
    %v789 = vsel %vm326, %v768, 0.0
    %790 = vadd.xlane.f32.xlu0 %v789
    %v791 = vpop.xlane.xlu0 %790
    %v792 = vsel %vm326, %v770, 0.0
    %793 = vadd.xlane.f32.xlu0 %v792
    %v794 = vpop.xlane.xlu0 %793
    %v795 = vrcp.pop %v773
    %v796 = vmul.f32 %v773, %v795
    %v797 = vsub.f32 1.0, %v796
    %v798 = vmul.f32 %v795, %v797
    %v799 = vadd.f32 %v795, %v798
    %vm800 = vweird.f32 %v773
    %vm801 = vweird.f32 %v795
    %vm802 = vmor %vm800, %vm801
    %v803 = vsel %vm802, %v795, %v799
    %v804 = vand.u32 2147483647, %v773
    %vm805 = vcmp.eq.f32.partialorder %v804, 8.507059e+37
    %v806 = vand.u32 %v773, 2147483648
    %v807 = vor.u32 1.1754944e-38, %v806
    %v808 = vsel %vm805, %v807, %v803
    %v809 = vmul.f32 %v756, %v808
    %v810 = vrcp.pop %v776
    %v811 = vmul.f32 %v776, %v810
    %v812 = vsub.f32 1.0, %v811
    %v813 = vmul.f32 %v810, %v812
    %v814 = vadd.f32 %v810, %v813
    %vm815 = vweird.f32 %v776
    %vm816 = vweird.f32 %v810
    %vm817 = vmor %vm815, %vm816
    %v818 = vsel %vm817, %v810, %v814
    %v819 = vand.u32 2147483647, %v776
    %vm820 = vcmp.eq.f32.partialorder %v819, 8.507059e+37
    %v821 = vand.u32 %v776, 2147483648
    %v822 = vor.u32 1.1754944e-38, %v821
    %v823 = vsel %vm820, %v822, %v818
    %v824 = vmul.f32 %v758, %v823
    %v825 = vrcp.pop %v779
    %v826 = vmul.f32 %v779, %v825
    %v827 = vsub.f32 1.0, %v826
    %v828 = vmul.f32 %v825, %v827
    %v829 = vadd.f32 %v825, %v828
    %vm830 = vweird.f32 %v779
    %vm831 = vweird.f32 %v825
    %vm832 = vmor %vm830, %vm831
    %v833 = vsel %vm832, %v825, %v829
    %v834 = vand.u32 2147483647, %v779
    %vm835 = vcmp.eq.f32.partialorder %v834, 8.507059e+37
    %v836 = vand.u32 %v779, 2147483648
    %v837 = vor.u32 1.1754944e-38, %v836
    %v838 = vsel %vm835, %v837, %v833
    %v839 = vmul.f32 %v760, %v838
    %v840 = vrcp.pop %v782
    %v841 = vmul.f32 %v782, %v840
    %v842 = vsub.f32 1.0, %v841
    %v843 = vmul.f32 %v840, %v842
    %v844 = vadd.f32 %v840, %v843
    %vm845 = vweird.f32 %v782
    %vm846 = vweird.f32 %v840
    %vm847 = vmor %vm845, %vm846
    %v848 = vsel %vm847, %v840, %v844
    %v849 = vand.u32 2147483647, %v782
    %vm850 = vcmp.eq.f32.partialorder %v849, 8.507059e+37
    %v851 = vand.u32 %v782, 2147483648
    %v852 = vor.u32 1.1754944e-38, %v851
    %v853 = vsel %vm850, %v852, %v848
    %v854 = vmul.f32 %v762, %v853
    %v855 = vrcp.pop %v785
    %v856 = vmul.f32 %v785, %v855
    %v857 = vsub.f32 1.0, %v856
    %v858 = vmul.f32 %v855, %v857
    %v859 = vadd.f32 %v855, %v858
    %vm860 = vweird.f32 %v785
    %vm861 = vweird.f32 %v855
    %vm862 = vmor %vm860, %vm861
    %v863 = vsel %vm862, %v855, %v859
    %v864 = vand.u32 2147483647, %v785
    %vm865 = vcmp.eq.f32.partialorder %v864, 8.507059e+37
    %v866 = vand.u32 %v785, 2147483648
    %v867 = vor.u32 1.1754944e-38, %v866
    %v868 = vsel %vm865, %v867, %v863
    %v869 = vmul.f32 %v764, %v868
    %v870 = vrcp.pop %v788
    %v871 = vmul.f32 %v788, %v870
    %v872 = vsub.f32 1.0, %v871
    %v873 = vmul.f32 %v870, %v872
    %v874 = vadd.f32 %v870, %v873
    %vm875 = vweird.f32 %v788
    %vm876 = vweird.f32 %v870
    %vm877 = vmor %vm875, %vm876
    %v878 = vsel %vm877, %v870, %v874
    %v879 = vand.u32 2147483647, %v788
    %vm880 = vcmp.eq.f32.partialorder %v879, 8.507059e+37
    %v881 = vand.u32 %v788, 2147483648
    %v882 = vor.u32 1.1754944e-38, %v881
    %v883 = vsel %vm880, %v882, %v878
    %v884 = vmul.f32 %v766, %v883
    %v885 = vrcp.pop %v791
    %v886 = vmul.f32 %v791, %v885
    %v887 = vsub.f32 1.0, %v886
    %v888 = vmul.f32 %v885, %v887
    %v889 = vadd.f32 %v885, %v888
    %vm890 = vweird.f32 %v791
    %vm891 = vweird.f32 %v885
    %vm892 = vmor %vm890, %vm891
    %v893 = vsel %vm892, %v885, %v889
    %v894 = vand.u32 2147483647, %v791
    %vm895 = vcmp.eq.f32.partialorder %v894, 8.507059e+37
    %v896 = vand.u32 %v791, 2147483648
    %v897 = vor.u32 1.1754944e-38, %v896
    %v898 = vsel %vm895, %v897, %v893
    %v899 = vmul.f32 %v768, %v898
    %v900 = vrcp.pop %v794
    %v901 = vmul.f32 %v794, %v900
    %v902 = vsub.f32 1.0, %v901
    %v903 = vmul.f32 %v900, %v902
    %v904 = vadd.f32 %v900, %v903
    %vm905 = vweird.f32 %v794
    %vm906 = vweird.f32 %v900
    %vm907 = vmor %vm905, %vm906
    %v908 = vsel %vm907, %v900, %v904
    %v909 = vand.u32 2147483647, %v794
    %vm910 = vcmp.eq.f32.partialorder %v909, 8.507059e+37
    %v911 = vand.u32 %v794, 2147483648
    %v912 = vor.u32 1.1754944e-38, %v911
    %v913 = vsel %vm910, %v912, %v908
    %v914 = vmul.f32 %v770, %v913
    %919 = vrot.lane.b32.xlu0 %v173, 112
    %v920 = vpop.permute.xlu0 %919
    %921 = vrot.lane.b32.xlu0 %v176, 112
    %v922 = vpop.permute.xlu0 %921
    %923 = vrot.lane.b32.xlu0 %v179, 112
    %v924 = vpop.permute.xlu0 %923
    %925 = vrot.lane.b32.xlu0 %v182, 112
    %v926 = vpop.permute.xlu0 %925
    %v932 = vsel %vm326, %v809, 0
    %v935 = vsel %vm326, %v824, 0
    %v938 = vsel %vm326, %v839, 0
    %v941 = vsel %vm326, %v854, 0
    %943 = vmatpush.msra.mxu0 0.0
    %944 = vmatpush.msra.mxu0 0.0
    %945 = vmatpush.msra.mxu0 0.0
    %946 = vmatpush.msra.mxu0 0.0
    %947 = vmatpush.msra.mxu0 0.0
    %948 = vmatpush.msra.mxu0 0.0
    %949 = vmatpush.msra.mxu0 0.0
    %950 = vmatpush.msra.mxu0 0.0
    %951 = vmatpush.msra.mxu0 0.0
    %952 = vmatpush.msra.mxu0 0.0
    %953 = vmatpush.msra.mxu0 0.0
    %954 = vmatpush.msra.mxu0 0.0
    %955 = vmatpush.msra.mxu0 %v926
    %956 = vmatpush.msra.mxu0 %v924
    %957 = vmatpush.msra.mxu0 %v922
    %958 = vmatpush.msra.mxu0 %v920
    %959 = vmatmul.f32.gmra.mxu0 %v932
    %v960 = vpop.f32.mrf.mxu0
    %v961 = vadd.f32 0.0, %v960
    %962 = vmatmul.f32.gmra.mxu0 %v935
    %v963 = vpop.f32.mrf.mxu0
    %v964 = vadd.f32 0.0, %v963
    %965 = vmatmul.f32.gmra.mxu0 %v938
    %v966 = vpop.f32.mrf.mxu0
    %v967 = vadd.f32 0.0, %v966
    %968 = vmatmul.f32.gmra.mxu0 %v941
    %v969 = vpop.f32.mrf.mxu0
    %v970 = vadd.f32 0.0, %v969
    %971 = vdwg.mxu0
    %976 = vrot.lane.b32.xlu0 %v185, 112
    %v977 = vpop.permute.xlu0 %976
    %978 = vrot.lane.b32.xlu0 %v188, 112
    %v979 = vpop.permute.xlu0 %978
    %980 = vrot.lane.b32.xlu0 %v191, 112
    %v981 = vpop.permute.xlu0 %980
    %982 = vrot.lane.b32.xlu0 %v194, 112
    %v983 = vpop.permute.xlu0 %982
    %v989 = vsel %vm326, %v869, 0
    %v992 = vsel %vm326, %v884, 0
    %v995 = vsel %vm326, %v899, 0
    %v998 = vsel %vm326, %v914, 0
    %1000 = vmatpush.msra.mxu0 0.0
    %1001 = vmatpush.msra.mxu0 0.0
    %1002 = vmatpush.msra.mxu0 0.0
    %1003 = vmatpush.msra.mxu0 0.0
    %1004 = vmatpush.msra.mxu0 0.0
    %1005 = vmatpush.msra.mxu0 0.0
    %1006 = vmatpush.msra.mxu0 0.0
    %1007 = vmatpush.msra.mxu0 0.0
    %1008 = vmatpush.msra.mxu0 0.0
    %1009 = vmatpush.msra.mxu0 0.0
    %1010 = vmatpush.msra.mxu0 0.0
    %1011 = vmatpush.msra.mxu0 0.0
    %1012 = vmatpush.msra.mxu0 %v983
    %1013 = vmatpush.msra.mxu0 %v981
    %1014 = vmatpush.msra.mxu0 %v979
    %1015 = vmatpush.msra.mxu0 %v977
    %1016 = vmatmul.f32.gmra.mxu0 %v989
    %v1017 = vpop.f32.mrf.mxu0
    %v1018 = vadd.f32 0.0, %v1017
    %1019 = vmatmul.f32.gmra.mxu0 %v992
    %v1020 = vpop.f32.mrf.mxu0
    %v1021 = vadd.f32 0.0, %v1020
    %1022 = vmatmul.f32.gmra.mxu0 %v995
    %v1023 = vpop.f32.mrf.mxu0
    %v1024 = vadd.f32 0.0, %v1023
    %1025 = vmatmul.f32.gmra.mxu0 %v998
    %v1026 = vpop.f32.mrf.mxu0
    %v1027 = vadd.f32 0.0, %v1026
    %1028 = vdwg.mxu0
    %1029 = vrot.lane.b32.xlu0 %v132, 96
    %v1030 = vpop.permute.xlu0 %1029
    %1031 = vrot.lane.b32.xlu0 %v135, 96
    %v1032 = vpop.permute.xlu0 %1031
    %1033 = vrot.lane.b32.xlu0 %v138, 96
    %v1034 = vpop.permute.xlu0 %1033
    %1035 = vrot.lane.b32.xlu0 %v141, 96
    %v1036 = vpop.permute.xlu0 %1035
    %1037 = vrot.lane.b32.xlu0 %v132, 32
    %v1038 = vpop.permute.xlu0 %1037
    %1039 = vrot.lane.b32.xlu0 %v135, 32
    %v1040 = vpop.permute.xlu0 %1039
    %1041 = vrot.lane.b32.xlu0 %v138, 32
    %v1042 = vpop.permute.xlu0 %1041
    %1043 = vrot.lane.b32.xlu0 %v141, 32
    %v1044 = vpop.permute.xlu0 %1043
    %v1045 = vsel %vm223, %v1030, 0
    %v1047 = vsel %vm223, %v1032, 0
    %v1049 = vsel %vm223, %v1034, 0
    %v1051 = vsel %vm223, %v1036, 0
    %v1053 = vsel %vm223, %v1038, 0
    %v1055 = vsel %vm223, %v1040, 0
    %v1057 = vsel %vm223, %v1042, 0
    %v1059 = vsel %vm223, %v1044, 0
    %1061 = vmatpush.xpose.msra.mxu0 0.0
    %1062 = vmatpush.xpose.msra.mxu0 0.0
    %1063 = vmatpush.xpose.msra.mxu0 0.0
    %1064 = vmatpush.xpose.msra.mxu0 0.0
    %1065 = vmatpush.xpose.msra.mxu0 0.0
    %1066 = vmatpush.xpose.msra.mxu0 0.0
    %1067 = vmatpush.xpose.msra.mxu0 0.0
    %1068 = vmatpush.xpose.msra.mxu0 0.0
    %1069 = vmatpush.xpose.msra.mxu0 0.0
    %1070 = vmatpush.xpose.msra.mxu0 0.0
    %1071 = vmatpush.xpose.msra.mxu0 0.0
    %1072 = vmatpush.xpose.msra.mxu0 0.0
    %1073 = vmatpush.xpose.msra.mxu0 %v1059
    %1074 = vmatpush.xpose.msra.mxu0 %v1057
    %1075 = vmatpush.xpose.msra.mxu0 %v1055
    %1076 = vmatpush.xpose.msra.mxu0 %v1053
    %1077 = vmatmul.f32.gmra.mxu0 %v1045
    %v1078 = vpop.f32.mrf.mxu0
    %v1079 = vadd.f32 %v207, %v1078
    %1080 = vmatmul.f32.gmra.mxu0 %v1047
    %v1081 = vpop.f32.mrf.mxu0
    %v1082 = vadd.f32 %v208, %v1081
    %1083 = vmatmul.f32.gmra.mxu0 %v1049
    %v1084 = vpop.f32.mrf.mxu0
    %v1085 = vadd.f32 %v209, %v1084
    %1086 = vmatmul.f32.gmra.mxu0 %v1051
    %v1087 = vpop.f32.mrf.mxu0
    %v1088 = vadd.f32 %v210, %v1087
    %1089 = vdwg.mxu0
    %1090 = vrot.lane.b32.xlu0 %v144, 96
    %v1091 = vpop.permute.xlu0 %1090
    %1092 = vrot.lane.b32.xlu0 %v147, 96
    %v1093 = vpop.permute.xlu0 %1092
    %1094 = vrot.lane.b32.xlu0 %v150, 96
    %v1095 = vpop.permute.xlu0 %1094
    %1096 = vrot.lane.b32.xlu0 %v153, 96
    %v1097 = vpop.permute.xlu0 %1096
    %1098 = vrot.lane.b32.xlu0 %v144, 32
    %v1099 = vpop.permute.xlu0 %1098
    %1100 = vrot.lane.b32.xlu0 %v147, 32
    %v1101 = vpop.permute.xlu0 %1100
    %1102 = vrot.lane.b32.xlu0 %v150, 32
    %v1103 = vpop.permute.xlu0 %1102
    %1104 = vrot.lane.b32.xlu0 %v153, 32
    %v1105 = vpop.permute.xlu0 %1104
    %v1106 = vsel %vm223, %v1091, 0
    %v1108 = vsel %vm223, %v1093, 0
    %v1110 = vsel %vm223, %v1095, 0
    %v1112 = vsel %vm223, %v1097, 0
    %v1114 = vsel %vm223, %v1099, 0
    %v1116 = vsel %vm223, %v1101, 0
    %v1118 = vsel %vm223, %v1103, 0
    %v1120 = vsel %vm223, %v1105, 0
    %1122 = vmatpush.xpose.msra.mxu0 0.0
    %1123 = vmatpush.xpose.msra.mxu0 0.0
    %1124 = vmatpush.xpose.msra.mxu0 0.0
    %1125 = vmatpush.xpose.msra.mxu0 0.0
    %1126 = vmatpush.xpose.msra.mxu0 0.0
    %1127 = vmatpush.xpose.msra.mxu0 0.0
    %1128 = vmatpush.xpose.msra.mxu0 0.0
    %1129 = vmatpush.xpose.msra.mxu0 0.0
    %1130 = vmatpush.xpose.msra.mxu0 0.0
    %1131 = vmatpush.xpose.msra.mxu0 0.0
    %1132 = vmatpush.xpose.msra.mxu0 0.0
    %1133 = vmatpush.xpose.msra.mxu0 0.0
    %1134 = vmatpush.xpose.msra.mxu0 %v1120
    %1135 = vmatpush.xpose.msra.mxu0 %v1118
    %1136 = vmatpush.xpose.msra.mxu0 %v1116
    %1137 = vmatpush.xpose.msra.mxu0 %v1114
    %1138 = vmatmul.f32.gmra.mxu0 %v1106
    %v1139 = vpop.f32.mrf.mxu0
    %v1140 = vadd.f32 %v207, %v1139
    %1141 = vmatmul.f32.gmra.mxu0 %v1108
    %v1142 = vpop.f32.mrf.mxu0
    %v1143 = vadd.f32 %v208, %v1142
    %1144 = vmatmul.f32.gmra.mxu0 %v1110
    %v1145 = vpop.f32.mrf.mxu0
    %v1146 = vadd.f32 %v209, %v1145
    %1147 = vmatmul.f32.gmra.mxu0 %v1112
    %v1148 = vpop.f32.mrf.mxu0
    %v1149 = vadd.f32 %v210, %v1148
    %1150 = vdwg.mxu0
    %v1151 = vsel %vm326, %v1079, -inf
    %1152 = vmax.xlane.f32.xlu0 %v1151
    %v1153 = vpop.xlane.xlu0 %1152
    %v1154 = vsel %vm326, %v1082, -inf
    %1155 = vmax.xlane.f32.xlu0 %v1154
    %v1156 = vpop.xlane.xlu0 %1155
    %v1157 = vsel %vm326, %v1085, -inf
    %1158 = vmax.xlane.f32.xlu0 %v1157
    %v1159 = vpop.xlane.xlu0 %1158
    %v1160 = vsel %vm326, %v1088, -inf
    %1161 = vmax.xlane.f32.xlu0 %v1160
    %v1162 = vpop.xlane.xlu0 %1161
    %v1163 = vsel %vm326, %v1140, -inf
    %1164 = vmax.xlane.f32.xlu0 %v1163
    %v1165 = vpop.xlane.xlu0 %1164
    %v1166 = vsel %vm326, %v1143, -inf
    %1167 = vmax.xlane.f32.xlu0 %v1166
    %v1168 = vpop.xlane.xlu0 %1167
    %v1169 = vsel %vm326, %v1146, -inf
    %1170 = vmax.xlane.f32.xlu0 %v1169
    %v1171 = vpop.xlane.xlu0 %1170
    %v1172 = vsel %vm326, %v1149, -inf
    %1173 = vmax.xlane.f32.xlu0 %v1172
    %v1174 = vpop.xlane.xlu0 %1173
    %v1175 = vsub.f32 %v1079, %v1153
    %v1176 = vsub.f32 %v1082, %v1156
    %v1177 = vsub.f32 %v1085, %v1159
    %v1178 = vsub.f32 %v1088, %v1162
    %v1179 = vsub.f32 %v1140, %v1165
    %v1180 = vsub.f32 %v1143, %v1168
    %v1181 = vsub.f32 %v1146, %v1171
    %v1182 = vsub.f32 %v1149, %v1174
    %v1183 = vmul.f32 %v1175, 1.442695
    %v1184 = vpow.pop %v1183
    %v1185 = vmul.f32 %v1176, 1.442695
    %v1186 = vpow.pop %v1185
    %v1187 = vmul.f32 %v1177, 1.442695
    %v1188 = vpow.pop %v1187
    %v1189 = vmul.f32 %v1178, 1.442695
    %v1190 = vpow.pop %v1189
    %v1191 = vmul.f32 %v1179, 1.442695
    %v1192 = vpow.pop %v1191
    %v1193 = vmul.f32 %v1180, 1.442695
    %v1194 = vpow.pop %v1193
    %v1195 = vmul.f32 %v1181, 1.442695
    %v1196 = vpow.pop %v1195
    %v1197 = vmul.f32 %v1182, 1.442695
    %v1198 = vpow.pop %v1197
    %v1199 = vsel %vm326, %v1184, 0.0
    %1200 = vadd.xlane.f32.xlu0 %v1199
    %v1201 = vpop.xlane.xlu0 %1200
    %v1202 = vsel %vm326, %v1186, 0.0
    %1203 = vadd.xlane.f32.xlu0 %v1202
    %v1204 = vpop.xlane.xlu0 %1203
    %v1205 = vsel %vm326, %v1188, 0.0
    %1206 = vadd.xlane.f32.xlu0 %v1205
    %v1207 = vpop.xlane.xlu0 %1206
    %v1208 = vsel %vm326, %v1190, 0.0
    %1209 = vadd.xlane.f32.xlu0 %v1208
    %v1210 = vpop.xlane.xlu0 %1209
    %v1211 = vsel %vm326, %v1192, 0.0
    %1212 = vadd.xlane.f32.xlu0 %v1211
    %v1213 = vpop.xlane.xlu0 %1212
    %v1214 = vsel %vm326, %v1194, 0.0
    %1215 = vadd.xlane.f32.xlu0 %v1214
    %v1216 = vpop.xlane.xlu0 %1215
    %v1217 = vsel %vm326, %v1196, 0.0
    %1218 = vadd.xlane.f32.xlu0 %v1217
    %v1219 = vpop.xlane.xlu0 %1218
    %v1220 = vsel %vm326, %v1198, 0.0
    %1221 = vadd.xlane.f32.xlu0 %v1220
    %v1222 = vpop.xlane.xlu0 %1221
    %v1223 = vrcp.pop %v1201
    %v1224 = vmul.f32 %v1201, %v1223
    %v1225 = vsub.f32 1.0, %v1224
    %v1226 = vmul.f32 %v1223, %v1225
    %v1227 = vadd.f32 %v1223, %v1226
    %vm1228 = vweird.f32 %v1201
    %vm1229 = vweird.f32 %v1223
    %vm1230 = vmor %vm1228, %vm1229
    %v1231 = vsel %vm1230, %v1223, %v1227
    %v1232 = vand.u32 2147483647, %v1201
    %vm1233 = vcmp.eq.f32.partialorder %v1232, 8.507059e+37
    %v1234 = vand.u32 %v1201, 2147483648
    %v1235 = vor.u32 1.1754944e-38, %v1234
    %v1236 = vsel %vm1233, %v1235, %v1231
    %v1237 = vmul.f32 %v1184, %v1236
    %v1238 = vrcp.pop %v1204
    %v1239 = vmul.f32 %v1204, %v1238
    %v1240 = vsub.f32 1.0, %v1239
    %v1241 = vmul.f32 %v1238, %v1240
    %v1242 = vadd.f32 %v1238, %v1241
    %vm1243 = vweird.f32 %v1204
    %vm1244 = vweird.f32 %v1238
    %vm1245 = vmor %vm1243, %vm1244
    %v1246 = vsel %vm1245, %v1238, %v1242
    %v1247 = vand.u32 2147483647, %v1204
    %vm1248 = vcmp.eq.f32.partialorder %v1247, 8.507059e+37
    %v1249 = vand.u32 %v1204, 2147483648
    %v1250 = vor.u32 1.1754944e-38, %v1249
    %v1251 = vsel %vm1248, %v1250, %v1246
    %v1252 = vmul.f32 %v1186, %v1251
    %v1253 = vrcp.pop %v1207
    %v1254 = vmul.f32 %v1207, %v1253
    %v1255 = vsub.f32 1.0, %v1254
    %v1256 = vmul.f32 %v1253, %v1255
    %v1257 = vadd.f32 %v1253, %v1256
    %vm1258 = vweird.f32 %v1207
    %vm1259 = vweird.f32 %v1253
    %vm1260 = vmor %vm1258, %vm1259
    %v1261 = vsel %vm1260, %v1253, %v1257
    %v1262 = vand.u32 2147483647, %v1207
    %vm1263 = vcmp.eq.f32.partialorder %v1262, 8.507059e+37
    %v1264 = vand.u32 %v1207, 2147483648
    %v1265 = vor.u32 1.1754944e-38, %v1264
    %v1266 = vsel %vm1263, %v1265, %v1261
    %v1267 = vmul.f32 %v1188, %v1266
    %v1268 = vrcp.pop %v1210
    %v1269 = vmul.f32 %v1210, %v1268
    %v1270 = vsub.f32 1.0, %v1269
    %v1271 = vmul.f32 %v1268, %v1270
    %v1272 = vadd.f32 %v1268, %v1271
    %vm1273 = vweird.f32 %v1210
    %vm1274 = vweird.f32 %v1268
    %vm1275 = vmor %vm1273, %vm1274
    %v1276 = vsel %vm1275, %v1268, %v1272
    %v1277 = vand.u32 2147483647, %v1210
    %vm1278 = vcmp.eq.f32.partialorder %v1277, 8.507059e+37
    %v1279 = vand.u32 %v1210, 2147483648
    %v1280 = vor.u32 1.1754944e-38, %v1279
    %v1281 = vsel %vm1278, %v1280, %v1276
    %v1282 = vmul.f32 %v1190, %v1281
    %v1283 = vrcp.pop %v1213
    %v1284 = vmul.f32 %v1213, %v1283
    %v1285 = vsub.f32 1.0, %v1284
    %v1286 = vmul.f32 %v1283, %v1285
    %v1287 = vadd.f32 %v1283, %v1286
    %vm1288 = vweird.f32 %v1213
    %vm1289 = vweird.f32 %v1283
    %vm1290 = vmor %vm1288, %vm1289
    %v1291 = vsel %vm1290, %v1283, %v1287
    %v1292 = vand.u32 2147483647, %v1213
    %vm1293 = vcmp.eq.f32.partialorder %v1292, 8.507059e+37
    %v1294 = vand.u32 %v1213, 2147483648
    %v1295 = vor.u32 1.1754944e-38, %v1294
    %v1296 = vsel %vm1293, %v1295, %v1291
    %v1297 = vmul.f32 %v1192, %v1296
    %v1298 = vrcp.pop %v1216
    %v1299 = vmul.f32 %v1216, %v1298
    %v1300 = vsub.f32 1.0, %v1299
    %v1301 = vmul.f32 %v1298, %v1300
    %v1302 = vadd.f32 %v1298, %v1301
    %vm1303 = vweird.f32 %v1216
    %vm1304 = vweird.f32 %v1298
    %vm1305 = vmor %vm1303, %vm1304
    %v1306 = vsel %vm1305, %v1298, %v1302
    %v1307 = vand.u32 2147483647, %v1216
    %vm1308 = vcmp.eq.f32.partialorder %v1307, 8.507059e+37
    %v1309 = vand.u32 %v1216, 2147483648
    %v1310 = vor.u32 1.1754944e-38, %v1309
    %v1311 = vsel %vm1308, %v1310, %v1306
    %v1312 = vmul.f32 %v1194, %v1311
    %v1313 = vrcp.pop %v1219
    %v1314 = vmul.f32 %v1219, %v1313
    %v1315 = vsub.f32 1.0, %v1314
    %v1316 = vmul.f32 %v1313, %v1315
    %v1317 = vadd.f32 %v1313, %v1316
    %vm1318 = vweird.f32 %v1219
    %vm1319 = vweird.f32 %v1313
    %vm1320 = vmor %vm1318, %vm1319
    %v1321 = vsel %vm1320, %v1313, %v1317
    %v1322 = vand.u32 2147483647, %v1219
    %vm1323 = vcmp.eq.f32.partialorder %v1322, 8.507059e+37
    %v1324 = vand.u32 %v1219, 2147483648
    %v1325 = vor.u32 1.1754944e-38, %v1324
    %v1326 = vsel %vm1323, %v1325, %v1321
    %v1327 = vmul.f32 %v1196, %v1326
    %v1328 = vrcp.pop %v1222
    %v1329 = vmul.f32 %v1222, %v1328
    %v1330 = vsub.f32 1.0, %v1329
    %v1331 = vmul.f32 %v1328, %v1330
    %v1332 = vadd.f32 %v1328, %v1331
    %vm1333 = vweird.f32 %v1222
    %vm1334 = vweird.f32 %v1328
    %vm1335 = vmor %vm1333, %vm1334
    %v1336 = vsel %vm1335, %v1328, %v1332
    %v1337 = vand.u32 2147483647, %v1222
    %vm1338 = vcmp.eq.f32.partialorder %v1337, 8.507059e+37
    %v1339 = vand.u32 %v1222, 2147483648
    %v1340 = vor.u32 1.1754944e-38, %v1339
    %v1341 = vsel %vm1338, %v1340, %v1336
    %v1342 = vmul.f32 %v1198, %v1341
    %1343 = vrot.lane.b32.xlu0 %v173, 96
    %v1344 = vpop.permute.xlu0 %1343
    %1345 = vrot.lane.b32.xlu0 %v176, 96
    %v1346 = vpop.permute.xlu0 %1345
    %1347 = vrot.lane.b32.xlu0 %v179, 96
    %v1348 = vpop.permute.xlu0 %1347
    %1349 = vrot.lane.b32.xlu0 %v182, 96
    %v1350 = vpop.permute.xlu0 %1349
    %v1356 = vsel %vm326, %v1237, 0
    %v1359 = vsel %vm326, %v1252, 0
    %v1362 = vsel %vm326, %v1267, 0
    %v1365 = vsel %vm326, %v1282, 0
    %1367 = vmatpush.msra.mxu0 0.0
    %1368 = vmatpush.msra.mxu0 0.0
    %1369 = vmatpush.msra.mxu0 0.0
    %1370 = vmatpush.msra.mxu0 0.0
    %1371 = vmatpush.msra.mxu0 0.0
    %1372 = vmatpush.msra.mxu0 0.0
    %1373 = vmatpush.msra.mxu0 0.0
    %1374 = vmatpush.msra.mxu0 0.0
    %1375 = vmatpush.msra.mxu0 0.0
    %1376 = vmatpush.msra.mxu0 0.0
    %1377 = vmatpush.msra.mxu0 0.0
    %1378 = vmatpush.msra.mxu0 0.0
    %1379 = vmatpush.msra.mxu0 %v1350
    %1380 = vmatpush.msra.mxu0 %v1348
    %1381 = vmatpush.msra.mxu0 %v1346
    %1382 = vmatpush.msra.mxu0 %v1344
    %1383 = vmatmul.f32.gmra.mxu0 %v1356
    %v1384 = vpop.f32.mrf.mxu0
    %v1385 = vadd.f32 0.0, %v1384
    %1386 = vmatmul.f32.gmra.mxu0 %v1359
    %v1387 = vpop.f32.mrf.mxu0
    %v1388 = vadd.f32 0.0, %v1387
    %1389 = vmatmul.f32.gmra.mxu0 %v1362
    %v1390 = vpop.f32.mrf.mxu0
    %v1391 = vadd.f32 0.0, %v1390
    %1392 = vmatmul.f32.gmra.mxu0 %v1365
    %v1393 = vpop.f32.mrf.mxu0
    %v1394 = vadd.f32 0.0, %v1393
    %1395 = vdwg.mxu0
    %1396 = vrot.lane.b32.xlu0 %v185, 96
    %v1397 = vpop.permute.xlu0 %1396
    %1398 = vrot.lane.b32.xlu0 %v188, 96
    %v1399 = vpop.permute.xlu0 %1398
    %1400 = vrot.lane.b32.xlu0 %v191, 96
    %v1401 = vpop.permute.xlu0 %1400
    %1402 = vrot.lane.b32.xlu0 %v194, 96
    %v1403 = vpop.permute.xlu0 %1402
    %v1409 = vsel %vm326, %v1297, 0
    %v1412 = vsel %vm326, %v1312, 0
    %v1415 = vsel %vm326, %v1327, 0
    %v1418 = vsel %vm326, %v1342, 0
    %1420 = vmatpush.msra.mxu0 0.0
    %1421 = vmatpush.msra.mxu0 0.0
    %1422 = vmatpush.msra.mxu0 0.0
    %1423 = vmatpush.msra.mxu0 0.0
    %1424 = vmatpush.msra.mxu0 0.0
    %1425 = vmatpush.msra.mxu0 0.0
    %1426 = vmatpush.msra.mxu0 0.0
    %1427 = vmatpush.msra.mxu0 0.0
    %1428 = vmatpush.msra.mxu0 0.0
    %1429 = vmatpush.msra.mxu0 0.0
    %1430 = vmatpush.msra.mxu0 0.0
    %1431 = vmatpush.msra.mxu0 0.0
    %1432 = vmatpush.msra.mxu0 %v1403
    %1433 = vmatpush.msra.mxu0 %v1401
    %1434 = vmatpush.msra.mxu0 %v1399
    %1435 = vmatpush.msra.mxu0 %v1397
    %1436 = vmatmul.f32.gmra.mxu0 %v1409
    %v1437 = vpop.f32.mrf.mxu0
    %v1438 = vadd.f32 0.0, %v1437
    %1439 = vmatmul.f32.gmra.mxu0 %v1412
    %v1440 = vpop.f32.mrf.mxu0
    %v1441 = vadd.f32 0.0, %v1440
    %1442 = vmatmul.f32.gmra.mxu0 %v1415
    %v1443 = vpop.f32.mrf.mxu0
    %v1444 = vadd.f32 0.0, %v1443
    %1445 = vmatmul.f32.gmra.mxu0 %v1418
    %v1446 = vpop.f32.mrf.mxu0
    %v1447 = vadd.f32 0.0, %v1446
    %1448 = vdwg.mxu0
    %1449 = vrot.lane.b32.xlu0 %v132, 80
    %v1450 = vpop.permute.xlu0 %1449
    %1451 = vrot.lane.b32.xlu0 %v135, 80
    %v1452 = vpop.permute.xlu0 %1451
    %1453 = vrot.lane.b32.xlu0 %v138, 80
    %v1454 = vpop.permute.xlu0 %1453
    %1455 = vrot.lane.b32.xlu0 %v141, 80
    %v1456 = vpop.permute.xlu0 %1455
    %1457 = vrot.lane.b32.xlu0 %v132, 16
    %v1458 = vpop.permute.xlu0 %1457
    %1459 = vrot.lane.b32.xlu0 %v135, 16
    %v1460 = vpop.permute.xlu0 %1459
    %1461 = vrot.lane.b32.xlu0 %v138, 16
    %v1462 = vpop.permute.xlu0 %1461
    %1463 = vrot.lane.b32.xlu0 %v141, 16
    %v1464 = vpop.permute.xlu0 %1463
    %v1465 = vsel %vm223, %v1450, 0
    %v1467 = vsel %vm223, %v1452, 0
    %v1469 = vsel %vm223, %v1454, 0
    %v1471 = vsel %vm223, %v1456, 0
    %v1473 = vsel %vm223, %v1458, 0
    %v1475 = vsel %vm223, %v1460, 0
    %v1477 = vsel %vm223, %v1462, 0
    %v1479 = vsel %vm223, %v1464, 0
    %1481 = vmatpush.xpose.msra.mxu0 0.0
    %1482 = vmatpush.xpose.msra.mxu0 0.0
    %1483 = vmatpush.xpose.msra.mxu0 0.0
    %1484 = vmatpush.xpose.msra.mxu0 0.0
    %1485 = vmatpush.xpose.msra.mxu0 0.0
    %1486 = vmatpush.xpose.msra.mxu0 0.0
    %1487 = vmatpush.xpose.msra.mxu0 0.0
    %1488 = vmatpush.xpose.msra.mxu0 0.0
    %1489 = vmatpush.xpose.msra.mxu0 0.0
    %1490 = vmatpush.xpose.msra.mxu0 0.0
    %1491 = vmatpush.xpose.msra.mxu0 0.0
    %1492 = vmatpush.xpose.msra.mxu0 0.0
    %1493 = vmatpush.xpose.msra.mxu0 %v1479
    %1494 = vmatpush.xpose.msra.mxu0 %v1477
    %1495 = vmatpush.xpose.msra.mxu0 %v1475
    %1496 = vmatpush.xpose.msra.mxu0 %v1473
    %1497 = vmatmul.f32.gmra.mxu0 %v1465
    %v1498 = vpop.f32.mrf.mxu0
    %v1499 = vadd.f32 %v207, %v1498
    %1500 = vmatmul.f32.gmra.mxu0 %v1467
    %v1501 = vpop.f32.mrf.mxu0
    %v1502 = vadd.f32 %v208, %v1501
    %1503 = vmatmul.f32.gmra.mxu0 %v1469
    %v1504 = vpop.f32.mrf.mxu0
    %v1505 = vadd.f32 %v209, %v1504
    %1506 = vmatmul.f32.gmra.mxu0 %v1471
    %v1507 = vpop.f32.mrf.mxu0
    %v1508 = vadd.f32 %v210, %v1507
    %1509 = vdwg.mxu0
    %1510 = vrot.lane.b32.xlu0 %v144, 80
    %v1511 = vpop.permute.xlu0 %1510
    %1512 = vrot.lane.b32.xlu0 %v147, 80
    %v1513 = vpop.permute.xlu0 %1512
    %1514 = vrot.lane.b32.xlu0 %v150, 80
    %v1515 = vpop.permute.xlu0 %1514
    %1516 = vrot.lane.b32.xlu0 %v153, 80
    %v1517 = vpop.permute.xlu0 %1516
    %1518 = vrot.lane.b32.xlu0 %v144, 16
    %v1519 = vpop.permute.xlu0 %1518
    %1520 = vrot.lane.b32.xlu0 %v147, 16
    %v1521 = vpop.permute.xlu0 %1520
    %1522 = vrot.lane.b32.xlu0 %v150, 16
    %v1523 = vpop.permute.xlu0 %1522
    %1524 = vrot.lane.b32.xlu0 %v153, 16
    %v1525 = vpop.permute.xlu0 %1524
    %v1526 = vsel %vm223, %v1511, 0
    %v1528 = vsel %vm223, %v1513, 0
    %v1530 = vsel %vm223, %v1515, 0
    %v1532 = vsel %vm223, %v1517, 0
    %v1534 = vsel %vm223, %v1519, 0
    %v1536 = vsel %vm223, %v1521, 0
    %v1538 = vsel %vm223, %v1523, 0
    %v1540 = vsel %vm223, %v1525, 0
    %1542 = vmatpush.xpose.msra.mxu0 0.0
    %1543 = vmatpush.xpose.msra.mxu0 0.0
    %1544 = vmatpush.xpose.msra.mxu0 0.0
    %1545 = vmatpush.xpose.msra.mxu0 0.0
    %1546 = vmatpush.xpose.msra.mxu0 0.0
    %1547 = vmatpush.xpose.msra.mxu0 0.0
    %1548 = vmatpush.xpose.msra.mxu0 0.0
    %1549 = vmatpush.xpose.msra.mxu0 0.0
    %1550 = vmatpush.xpose.msra.mxu0 0.0
    %1551 = vmatpush.xpose.msra.mxu0 0.0
    %1552 = vmatpush.xpose.msra.mxu0 0.0
    %1553 = vmatpush.xpose.msra.mxu0 0.0
    %1554 = vmatpush.xpose.msra.mxu0 %v1540
    %1555 = vmatpush.xpose.msra.mxu0 %v1538
    %1556 = vmatpush.xpose.msra.mxu0 %v1536
    %1557 = vmatpush.xpose.msra.mxu0 %v1534
    %1558 = vmatmul.f32.gmra.mxu0 %v1526
    %v1559 = vpop.f32.mrf.mxu0
    %v1560 = vadd.f32 %v207, %v1559
    %1561 = vmatmul.f32.gmra.mxu0 %v1528
    %v1562 = vpop.f32.mrf.mxu0
    %v1563 = vadd.f32 %v208, %v1562
    %1564 = vmatmul.f32.gmra.mxu0 %v1530
    %v1565 = vpop.f32.mrf.mxu0
    %v1566 = vadd.f32 %v209, %v1565
    %1567 = vmatmul.f32.gmra.mxu0 %v1532
    %v1568 = vpop.f32.mrf.mxu0
    %v1569 = vadd.f32 %v210, %v1568
    %1570 = vdwg.mxu0
    %v1571 = vsel %vm326, %v1499, -inf
    %1572 = vmax.xlane.f32.xlu0 %v1571
    %v1573 = vpop.xlane.xlu0 %1572
    %v1574 = vsel %vm326, %v1502, -inf
    %1575 = vmax.xlane.f32.xlu0 %v1574
    %v1576 = vpop.xlane.xlu0 %1575
    %v1577 = vsel %vm326, %v1505, -inf
    %1578 = vmax.xlane.f32.xlu0 %v1577
    %v1579 = vpop.xlane.xlu0 %1578
    %v1580 = vsel %vm326, %v1508, -inf
    %1581 = vmax.xlane.f32.xlu0 %v1580
    %v1582 = vpop.xlane.xlu0 %1581
    %v1583 = vsel %vm326, %v1560, -inf
    %1584 = vmax.xlane.f32.xlu0 %v1583
    %v1585 = vpop.xlane.xlu0 %1584
    %v1586 = vsel %vm326, %v1563, -inf
    %1587 = vmax.xlane.f32.xlu0 %v1586
    %v1588 = vpop.xlane.xlu0 %1587
    %v1589 = vsel %vm326, %v1566, -inf
    %1590 = vmax.xlane.f32.xlu0 %v1589
    %v1591 = vpop.xlane.xlu0 %1590
    %v1592 = vsel %vm326, %v1569, -inf
    %1593 = vmax.xlane.f32.xlu0 %v1592
    %v1594 = vpop.xlane.xlu0 %1593
    %v1595 = vsub.f32 %v1499, %v1573
    %v1596 = vsub.f32 %v1502, %v1576
    %v1597 = vsub.f32 %v1505, %v1579
    %v1598 = vsub.f32 %v1508, %v1582
    %v1599 = vsub.f32 %v1560, %v1585
    %v1600 = vsub.f32 %v1563, %v1588
    %v1601 = vsub.f32 %v1566, %v1591
    %v1602 = vsub.f32 %v1569, %v1594
    %v1603 = vmul.f32 %v1595, 1.442695
    %v1604 = vpow.pop %v1603
    %v1605 = vmul.f32 %v1596, 1.442695
    %v1606 = vpow.pop %v1605
    %v1607 = vmul.f32 %v1597, 1.442695
    %v1608 = vpow.pop %v1607
    %v1609 = vmul.f32 %v1598, 1.442695
    %v1610 = vpow.pop %v1609
    %v1611 = vmul.f32 %v1599, 1.442695
    %v1612 = vpow.pop %v1611
    %v1613 = vmul.f32 %v1600, 1.442695
    %v1614 = vpow.pop %v1613
    %v1615 = vmul.f32 %v1601, 1.442695
    %v1616 = vpow.pop %v1615
    %v1617 = vmul.f32 %v1602, 1.442695
    %v1618 = vpow.pop %v1617
    %v1619 = vsel %vm326, %v1604, 0.0
    %1620 = vadd.xlane.f32.xlu0 %v1619
    %v1621 = vpop.xlane.xlu0 %1620
    %v1622 = vsel %vm326, %v1606, 0.0
    %1623 = vadd.xlane.f32.xlu0 %v1622
    %v1624 = vpop.xlane.xlu0 %1623
    %v1625 = vsel %vm326, %v1608, 0.0
    %1626 = vadd.xlane.f32.xlu0 %v1625
    %v1627 = vpop.xlane.xlu0 %1626
    %v1628 = vsel %vm326, %v1610, 0.0
    %1629 = vadd.xlane.f32.xlu0 %v1628
    %v1630 = vpop.xlane.xlu0 %1629
    %v1631 = vsel %vm326, %v1612, 0.0
    %1632 = vadd.xlane.f32.xlu0 %v1631
    %v1633 = vpop.xlane.xlu0 %1632
    %v1634 = vsel %vm326, %v1614, 0.0
    %1635 = vadd.xlane.f32.xlu0 %v1634
    %v1636 = vpop.xlane.xlu0 %1635
    %v1637 = vsel %vm326, %v1616, 0.0
    %1638 = vadd.xlane.f32.xlu0 %v1637
    %v1639 = vpop.xlane.xlu0 %1638
    %v1640 = vsel %vm326, %v1618, 0.0
    %1641 = vadd.xlane.f32.xlu0 %v1640
    %v1642 = vpop.xlane.xlu0 %1641
    %v1643 = vrcp.pop %v1621
    %v1644 = vmul.f32 %v1621, %v1643
    %v1645 = vsub.f32 1.0, %v1644
    %v1646 = vmul.f32 %v1643, %v1645
    %v1647 = vadd.f32 %v1643, %v1646
    %vm1648 = vweird.f32 %v1621
    %vm1649 = vweird.f32 %v1643
    %vm1650 = vmor %vm1648, %vm1649
    %v1651 = vsel %vm1650, %v1643, %v1647
    %v1652 = vand.u32 2147483647, %v1621
    %vm1653 = vcmp.eq.f32.partialorder %v1652, 8.507059e+37
    %v1654 = vand.u32 %v1621, 2147483648
    %v1655 = vor.u32 1.1754944e-38, %v1654
    %v1656 = vsel %vm1653, %v1655, %v1651
    %v1657 = vmul.f32 %v1604, %v1656
    %v1658 = vrcp.pop %v1624
    %v1659 = vmul.f32 %v1624, %v1658
    %v1660 = vsub.f32 1.0, %v1659
    %v1661 = vmul.f32 %v1658, %v1660
    %v1662 = vadd.f32 %v1658, %v1661
    %vm1663 = vweird.f32 %v1624
    %vm1664 = vweird.f32 %v1658
    %vm1665 = vmor %vm1663, %vm1664
    %v1666 = vsel %vm1665, %v1658, %v1662
    %v1667 = vand.u32 2147483647, %v1624
    %vm1668 = vcmp.eq.f32.partialorder %v1667, 8.507059e+37
    %v1669 = vand.u32 %v1624, 2147483648
    %v1670 = vor.u32 1.1754944e-38, %v1669
    %v1671 = vsel %vm1668, %v1670, %v1666
    %v1672 = vmul.f32 %v1606, %v1671
    %v1673 = vrcp.pop %v1627
    %v1674 = vmul.f32 %v1627, %v1673
    %v1675 = vsub.f32 1.0, %v1674
    %v1676 = vmul.f32 %v1673, %v1675
    %v1677 = vadd.f32 %v1673, %v1676
    %vm1678 = vweird.f32 %v1627
    %vm1679 = vweird.f32 %v1673
    %vm1680 = vmor %vm1678, %vm1679
    %v1681 = vsel %vm1680, %v1673, %v1677
    %v1682 = vand.u32 2147483647, %v1627
    %vm1683 = vcmp.eq.f32.partialorder %v1682, 8.507059e+37
    %v1684 = vand.u32 %v1627, 2147483648
    %v1685 = vor.u32 1.1754944e-38, %v1684
    %v1686 = vsel %vm1683, %v1685, %v1681
    %v1687 = vmul.f32 %v1608, %v1686
    %v1688 = vrcp.pop %v1630
    %v1689 = vmul.f32 %v1630, %v1688
    %v1690 = vsub.f32 1.0, %v1689
    %v1691 = vmul.f32 %v1688, %v1690
    %v1692 = vadd.f32 %v1688, %v1691
    %vm1693 = vweird.f32 %v1630
    %vm1694 = vweird.f32 %v1688
    %vm1695 = vmor %vm1693, %vm1694
    %v1696 = vsel %vm1695, %v1688, %v1692
    %v1697 = vand.u32 2147483647, %v1630
    %vm1698 = vcmp.eq.f32.partialorder %v1697, 8.507059e+37
    %v1699 = vand.u32 %v1630, 2147483648
    %v1700 = vor.u32 1.1754944e-38, %v1699
    %v1701 = vsel %vm1698, %v1700, %v1696
    %v1702 = vmul.f32 %v1610, %v1701
    %v1703 = vrcp.pop %v1633
    %v1704 = vmul.f32 %v1633, %v1703
    %v1705 = vsub.f32 1.0, %v1704
    %v1706 = vmul.f32 %v1703, %v1705
    %v1707 = vadd.f32 %v1703, %v1706
    %vm1708 = vweird.f32 %v1633
    %vm1709 = vweird.f32 %v1703
    %vm1710 = vmor %vm1708, %vm1709
    %v1711 = vsel %vm1710, %v1703, %v1707
    %v1712 = vand.u32 2147483647, %v1633
    %vm1713 = vcmp.eq.f32.partialorder %v1712, 8.507059e+37
    %v1714 = vand.u32 %v1633, 2147483648
    %v1715 = vor.u32 1.1754944e-38, %v1714
    %v1716 = vsel %vm1713, %v1715, %v1711
    %v1717 = vmul.f32 %v1612, %v1716
    %v1718 = vrcp.pop %v1636
    %v1719 = vmul.f32 %v1636, %v1718
    %v1720 = vsub.f32 1.0, %v1719
    %v1721 = vmul.f32 %v1718, %v1720
    %v1722 = vadd.f32 %v1718, %v1721
    %vm1723 = vweird.f32 %v1636
    %vm1724 = vweird.f32 %v1718
    %vm1725 = vmor %vm1723, %vm1724
    %v1726 = vsel %vm1725, %v1718, %v1722
    %v1727 = vand.u32 2147483647, %v1636
    %vm1728 = vcmp.eq.f32.partialorder %v1727, 8.507059e+37
    %v1729 = vand.u32 %v1636, 2147483648
    %v1730 = vor.u32 1.1754944e-38, %v1729
    %v1731 = vsel %vm1728, %v1730, %v1726
    %v1732 = vmul.f32 %v1614, %v1731
    %v1733 = vrcp.pop %v1639
    %v1734 = vmul.f32 %v1639, %v1733
    %v1735 = vsub.f32 1.0, %v1734
    %v1736 = vmul.f32 %v1733, %v1735
    %v1737 = vadd.f32 %v1733, %v1736
    %vm1738 = vweird.f32 %v1639
    %vm1739 = vweird.f32 %v1733
    %vm1740 = vmor %vm1738, %vm1739
    %v1741 = vsel %vm1740, %v1733, %v1737
    %v1742 = vand.u32 2147483647, %v1639
    %vm1743 = vcmp.eq.f32.partialorder %v1742, 8.507059e+37
    %v1744 = vand.u32 %v1639, 2147483648
    %v1745 = vor.u32 1.1754944e-38, %v1744
    %v1746 = vsel %vm1743, %v1745, %v1741
    %v1747 = vmul.f32 %v1616, %v1746
    %v1748 = vrcp.pop %v1642
    %v1749 = vmul.f32 %v1642, %v1748
    %v1750 = vsub.f32 1.0, %v1749
    %v1751 = vmul.f32 %v1748, %v1750
    %v1752 = vadd.f32 %v1748, %v1751
    %vm1753 = vweird.f32 %v1642
    %vm1754 = vweird.f32 %v1748
    %vm1755 = vmor %vm1753, %vm1754
    %v1756 = vsel %vm1755, %v1748, %v1752
    %v1757 = vand.u32 2147483647, %v1642
    %vm1758 = vcmp.eq.f32.partialorder %v1757, 8.507059e+37
    %v1759 = vand.u32 %v1642, 2147483648
    %v1760 = vor.u32 1.1754944e-38, %v1759
    %v1761 = vsel %vm1758, %v1760, %v1756
    %v1762 = vmul.f32 %v1618, %v1761
    %1763 = vrot.lane.b32.xlu0 %v173, 80
    %v1764 = vpop.permute.xlu0 %1763
    %1765 = vrot.lane.b32.xlu0 %v176, 80
    %v1766 = vpop.permute.xlu0 %1765
    %1767 = vrot.lane.b32.xlu0 %v179, 80
    %v1768 = vpop.permute.xlu0 %1767
    %1769 = vrot.lane.b32.xlu0 %v182, 80
    %v1770 = vpop.permute.xlu0 %1769
    %v1776 = vsel %vm326, %v1657, 0
    %v1779 = vsel %vm326, %v1672, 0
    %v1782 = vsel %vm326, %v1687, 0
    %v1785 = vsel %vm326, %v1702, 0
    %1787 = vmatpush.msra.mxu0 0.0
    %1788 = vmatpush.msra.mxu0 0.0
    %1789 = vmatpush.msra.mxu0 0.0
    %1790 = vmatpush.msra.mxu0 0.0
    %1791 = vmatpush.msra.mxu0 0.0
    %1792 = vmatpush.msra.mxu0 0.0
    %1793 = vmatpush.msra.mxu0 0.0
    %1794 = vmatpush.msra.mxu0 0.0
    %1795 = vmatpush.msra.mxu0 0.0
    %1796 = vmatpush.msra.mxu0 0.0
    %1797 = vmatpush.msra.mxu0 0.0
    %1798 = vmatpush.msra.mxu0 0.0
    %1799 = vmatpush.msra.mxu0 %v1770
    %1800 = vmatpush.msra.mxu0 %v1768
    %1801 = vmatpush.msra.mxu0 %v1766
    %1802 = vmatpush.msra.mxu0 %v1764
    %1803 = vmatmul.f32.gmra.mxu0 %v1776
    %v1804 = vpop.f32.mrf.mxu0
    %v1805 = vadd.f32 0.0, %v1804
    %1806 = vmatmul.f32.gmra.mxu0 %v1779
    %v1807 = vpop.f32.mrf.mxu0
    %v1808 = vadd.f32 0.0, %v1807
    %1809 = vmatmul.f32.gmra.mxu0 %v1782
    %v1810 = vpop.f32.mrf.mxu0
    %v1811 = vadd.f32 0.0, %v1810
    %1812 = vmatmul.f32.gmra.mxu0 %v1785
    %v1813 = vpop.f32.mrf.mxu0
    %v1814 = vadd.f32 0.0, %v1813
    %1815 = vdwg.mxu0
    %1816 = vrot.lane.b32.xlu0 %v185, 80
    %v1817 = vpop.permute.xlu0 %1816
    %1818 = vrot.lane.b32.xlu0 %v188, 80
    %v1819 = vpop.permute.xlu0 %1818
    %1820 = vrot.lane.b32.xlu0 %v191, 80
    %v1821 = vpop.permute.xlu0 %1820
    %1822 = vrot.lane.b32.xlu0 %v194, 80
    %v1823 = vpop.permute.xlu0 %1822
    %v1829 = vsel %vm326, %v1717, 0
    %v1832 = vsel %vm326, %v1732, 0
    %v1835 = vsel %vm326, %v1747, 0
    %v1838 = vsel %vm326, %v1762, 0
    %1840 = vmatpush.msra.mxu0 0.0
    %1841 = vmatpush.msra.mxu0 0.0
    %1842 = vmatpush.msra.mxu0 0.0
    %1843 = vmatpush.msra.mxu0 0.0
    %1844 = vmatpush.msra.mxu0 0.0
    %1845 = vmatpush.msra.mxu0 0.0
    %1846 = vmatpush.msra.mxu0 0.0
    %1847 = vmatpush.msra.mxu0 0.0
    %1848 = vmatpush.msra.mxu0 0.0
    %1849 = vmatpush.msra.mxu0 0.0
    %1850 = vmatpush.msra.mxu0 0.0
    %1851 = vmatpush.msra.mxu0 0.0
    %1852 = vmatpush.msra.mxu0 %v1823
    %1853 = vmatpush.msra.mxu0 %v1821
    %1854 = vmatpush.msra.mxu0 %v1819
    %1855 = vmatpush.msra.mxu0 %v1817
    %1856 = vmatmul.f32.gmra.mxu0 %v1829
    %v1857 = vpop.f32.mrf.mxu0
    %v1858 = vadd.f32 0.0, %v1857
    %1859 = vmatmul.f32.gmra.mxu0 %v1832
    %v1860 = vpop.f32.mrf.mxu0
    %v1861 = vadd.f32 0.0, %v1860
    %1862 = vmatmul.f32.gmra.mxu0 %v1835
    %v1863 = vpop.f32.mrf.mxu0
    %v1864 = vadd.f32 0.0, %v1863
    %1865 = vmatmul.f32.gmra.mxu0 %v1838
    %v1866 = vpop.f32.mrf.mxu0
    %v1867 = vadd.f32 0.0, %v1866
    %1868 = vdwg.mxu0
    %1877 = vrot.lane.b32.xlu0 %v961, 16
    %v1878 = vpop.permute.xlu0 %1877
    %1879 = vrot.lane.b32.xlu0 %v964, 16
    %v1880 = vpop.permute.xlu0 %1879
    %1881 = vrot.lane.b32.xlu0 %v967, 16
    %v1882 = vpop.permute.xlu0 %1881
    %1883 = vrot.lane.b32.xlu0 %v970, 16
    %v1884 = vpop.permute.xlu0 %1883
    %1885 = vrot.lane.b32.xlu0 %v1018, 16
    %v1886 = vpop.permute.xlu0 %1885
    %1887 = vrot.lane.b32.xlu0 %v1021, 16
    %v1888 = vpop.permute.xlu0 %1887
    %1889 = vrot.lane.b32.xlu0 %v1024, 16
    %v1890 = vpop.permute.xlu0 %1889
    %1891 = vrot.lane.b32.xlu0 %v1027, 16
    %v1892 = vpop.permute.xlu0 %1891
    %1909 = vrot.lane.b32.xlu0 %v1385, 32
    %v1910 = vpop.permute.xlu0 %1909
    %1911 = vrot.lane.b32.xlu0 %v1388, 32
    %v1912 = vpop.permute.xlu0 %1911
    %1913 = vrot.lane.b32.xlu0 %v1391, 32
    %v1914 = vpop.permute.xlu0 %1913
    %1915 = vrot.lane.b32.xlu0 %v1394, 32
    %v1916 = vpop.permute.xlu0 %1915
    %1917 = vrot.lane.b32.xlu0 %v1438, 32
    %v1918 = vpop.permute.xlu0 %1917
    %1919 = vrot.lane.b32.xlu0 %v1441, 32
    %v1920 = vpop.permute.xlu0 %1919
    %1921 = vrot.lane.b32.xlu0 %v1444, 32
    %v1922 = vpop.permute.xlu0 %1921
    %1923 = vrot.lane.b32.xlu0 %v1447, 32
    %v1924 = vpop.permute.xlu0 %1923
    %1941 = vrot.lane.b32.xlu0 %v1805, 48
    %v1942 = vpop.permute.xlu0 %1941
    %1943 = vrot.lane.b32.xlu0 %v1808, 48
    %v1944 = vpop.permute.xlu0 %1943
    %1945 = vrot.lane.b32.xlu0 %v1811, 48
    %v1946 = vpop.permute.xlu0 %1945
    %1947 = vrot.lane.b32.xlu0 %v1814, 48
    %v1948 = vpop.permute.xlu0 %1947
    %1949 = vrot.lane.b32.xlu0 %v1858, 48
    %v1950 = vpop.permute.xlu0 %1949
    %1951 = vrot.lane.b32.xlu0 %v1861, 48
    %v1952 = vpop.permute.xlu0 %1951
    %1953 = vrot.lane.b32.xlu0 %v1864, 48
    %v1954 = vpop.permute.xlu0 %1953
    %1955 = vrot.lane.b32.xlu0 %v1867, 48
    %v1956 = vpop.permute.xlu0 %1955
    %v1965 = vsel %vm223, %v549, %v1878
    %v1966 = vsel %vm223, %v552, %v1880
    %v1967 = vsel %vm223, %v555, %v1882
    %v1968 = vsel %vm223, %v558, %v1884
    %v1969 = vsel %vm223, %v590, %v1886
    %v1970 = vsel %vm223, %v593, %v1888
    %v1971 = vsel %vm223, %v596, %v1890
    %v1972 = vsel %vm223, %v599, %v1892
    %v1973 = vsel %vm326, %v1965, %v1910
    %v1974 = vsel %vm326, %v1966, %v1912
    %v1975 = vsel %vm326, %v1967, %v1914
    %v1976 = vsel %vm326, %v1968, %v1916
    %v1977 = vsel %vm326, %v1969, %v1918
    %v1978 = vsel %vm326, %v1970, %v1920
    %v1979 = vsel %vm326, %v1971, %v1922
    %v1980 = vsel %vm326, %v1972, %v1924
    %vm1981 = vcmask 392192
    %v1982 = vsel %vm1981, %v1973, %v1942
    %v1983 = vsel %vm1981, %v1974, %v1944
    %v1984 = vsel %vm1981, %v1975, %v1946
    %v1985 = vsel %vm1981, %v1976, %v1948
    %v1986 = vsel %vm1981, %v1977, %v1950
    %v1987 = vsel %vm1981, %v1978, %v1952
    %v1988 = vsel %vm1981, %v1979, %v1954
    %v1989 = vsel %vm1981, %v1980, %v1956
    %v1990 = vld [vmem:[#allocation7] sm:$0xff]
    %v1991 = vld [vmem:[#allocation7 + $0x8] sm:$0xff]
    %v1992 = vld [vmem:[#allocation7 + $0x10] sm:$0xff]
    %v1993 = vld [vmem:[#allocation7 + $0x18] sm:$0xff]
    %v1994 = vld [vmem:[#allocation7 + $0x20] sm:$0xff]
    %v1995 = vld [vmem:[#allocation7 + $0x28] sm:$0xff]
    %v1996 = vld [vmem:[#allocation7 + $0x30] sm:$0xff]
    %v1997 = vld [vmem:[#allocation7 + $0x38] sm:$0xff]
    %v1998 = vld [vmem:[%s3] sm:$0x1]
    %v2000 = vperm.slane %v1998, 0
    %v2003 = vsel %vm89, %v1982, 0
    %v2006 = vsel %vm89, %v1983, 0
    %v2009 = vsel %vm89, %v1984, 0
    %v2012 = vsel %vm89, %v1985, 0
    %v2015 = vsel %vm89, %v1986, 0
    %v2018 = vsel %vm89, %v1987, 0
    %v2021 = vsel %vm89, %v1988, 0
    %v2024 = vsel %vm89, %v1989, 0
    %2026 = vmatpush.msra.mxu0 0.0
    %2027 = vmatpush.msra.mxu0 0.0
    %2028 = vmatpush.msra.mxu0 0.0
    %2029 = vmatpush.msra.mxu0 0.0
    %2030 = vmatpush.msra.mxu0 0.0
    %2031 = vmatpush.msra.mxu0 0.0
    %2032 = vmatpush.msra.mxu0 0.0
    %2033 = vmatpush.msra.mxu0 0.0
    %2034 = vmatpush.msra.mxu0 %v1997
    %2035 = vmatpush.msra.mxu0 %v1996
    %2036 = vmatpush.msra.mxu0 %v1995
    %2037 = vmatpush.msra.mxu0 %v1994
    %2038 = vmatpush.msra.mxu0 %v1993
    %2039 = vmatpush.msra.mxu0 %v1992
    %2040 = vmatpush.msra.mxu0 %v1991
    %2041 = vmatpush.msra.mxu0 %v1990
    %2042 = vmatmul.f32.gmra.mxu0 %v2003
    %v2043 = vpop.f32.mrf.mxu0
    %v2044 = vadd.f32 %v2000, %v2043
    %2045 = vmatmul.f32.gmra.mxu0 %v2006
    %v2046 = vpop.f32.mrf.mxu0
    %v2047 = vadd.f32 %v2000, %v2046
    %2048 = vmatmul.f32.gmra.mxu0 %v2009
    %v2049 = vpop.f32.mrf.mxu0
    %v2050 = vadd.f32 %v2000, %v2049
    %2051 = vmatmul.f32.gmra.mxu0 %v2012
    %v2052 = vpop.f32.mrf.mxu0
    %v2053 = vadd.f32 %v2000, %v2052
    %2054 = vmatmul.f32.gmra.mxu0 %v2015
    %v2055 = vpop.f32.mrf.mxu0
    %v2056 = vadd.f32 %v2000, %v2055
    %2057 = vmatmul.f32.gmra.mxu0 %v2018
    %v2058 = vpop.f32.mrf.mxu0
    %v2059 = vadd.f32 %v2000, %v2058
    %2060 = vmatmul.f32.gmra.mxu0 %v2021
    %v2061 = vpop.f32.mrf.mxu0
    %v2062 = vadd.f32 %v2000, %v2061
    %2063 = vmatmul.f32.gmra.mxu0 %v2024
    %v2064 = vpop.f32.mrf.mxu0
    %v2065 = vadd.f32 %v2000, %v2064
    %2066 = vdwg.mxu0
    %2067 = vst.msk [vmem:[#allocation8] sm:$0xff] %vm89, %v2044
    %2068 = vst.msk [vmem:[#allocation8 + $0x8] sm:$0xff] %vm89, %v2047
    %2069 = vst.msk [vmem:[#allocation8 + $0x10] sm:$0xff] %vm89, %v2050
    %2070 = vst.msk [vmem:[#allocation8 + $0x18] sm:$0xff] %vm89, %v2053
    %2071 = vst.msk [vmem:[#allocation8 + $0x20] sm:$0xff] %vm89, %v2056
    %2072 = vst.msk [vmem:[#allocation8 + $0x28] sm:$0xff] %vm89, %v2059
    %2073 = vst.msk [vmem:[#allocation8 + $0x30] sm:$0xff] %vm89, %v2062
    %2074 = vst.msk [vmem:[#allocation8 + $0x38] sm:$0xff] %vm89, %v2065
    // Predicated region
    $region30: #{tpu_custom_call.1} parent=1 // pred_check
      _
    $region31: #{tpu_custom_call.1} parent=1 // pred_check_branch
      %2076 = sbr.rel (0) target = $region33
    $region32: #{tpu_custom_call.1} parent=1 // pred_region
      %2078 = vsyncadd [#allocation4], 0
      %s2079 = sshll.u32 [#allocation8], 4
      %s2080 = int_to_ptr.vmem [resolvable:$true] %s2079
      %s2081 = sshll.u32 %s4, 4
      %s2082 = int_to_ptr.hbm [resolvable:$true] %s2081
      %2087 = dma.vmem_to_hbm [thread:$0]  %s2080, 1024, %s2082, [#allocation4], 128, 128, 8
    $region33: #{tpu_custom_call.1} parent=1 // pred_fallthru
      _
    // Predicated region
    $region34: #{tpu_custom_call.1} parent=1 // pred_check
      _
    $region35: #{tpu_custom_call.1} parent=1 // pred_check_branch
      %2089 = sbr.rel (0) target = $region37
    $region36: #{tpu_custom_call.1} parent=1 // pred_region
      %2091 = dma.done [#allocation4], 1024
    $region37: #{tpu_custom_call.1} parent=1 // pred_fallthru
      _
    %2092 = vsyncpa [#allocation3], 1
    %2093 = vsyncpa [#allocation6], 1
    %2094 = vsyncpa [#allocation4], 1

</llo_original>
